<compile_context>
chip_gen: v7x
topology: tpu7x:2x2x1
jax: 0.10.0
libtpu: 0.0.40
codegen_flags: <defaults>
</compile_context>

<pallas_src>
import math
import functools

import jax
import jax.numpy as jnp
from jax.experimental import pallas as pl
from jax.experimental.pallas import tpu as pltpu


# ----------------------------------------------------------------------------
# Pallas kernel: one full Block forward over all batch rows at once.
# ----------------------------------------------------------------------------
def _layer_norm(h, w, eps=1e-5):
    mu = jnp.mean(h, axis=-1, keepdims=True)
    msq = jnp.mean(h * h, axis=-1, keepdims=True)
    var = msq - mu * mu
    return (h - mu) * jax.lax.rsqrt(var + eps) * w


def block_kernel(x_ref, ln1_ref, ln2_ref,
                 wq_ref, wk_ref, wv_ref, wproj_ref,
                 pswap_ref, ropeA_ref, ropeB_ref,
                 kmask_ref, vmask_ref, bias_ref, dblock_ref,
                 wupgate_ref, wdown_ref, out_ref,
                 *, n_head, head_size, resid_scale):
    M, C = x_ref.shape            # M = B*T
    H4 = 4 * C
    attn_scale = 1.0 / math.sqrt(head_size)
    f32 = jnp.float32

    x = x_ref[...]                # (M, C)

    # ---------------- attention branch ----------------
    h = _layer_norm(x, ln1_ref[...])

    # Three separate projections (each result lands at lane offset 0).
    # q/k weights are column-permuted to [all-heads even dims | all-heads odd].
    q = jnp.dot(h, wq_ref[...], preferred_element_type=f32)     # (M, C)
    k = jnp.dot(h, wk_ref[...], preferred_element_type=f32)     # (M, C)
    v = jnp.clip(jnp.dot(h, wv_ref[...], preferred_element_type=f32),
                 -100.0, 100.0)                                  # (M, C) natural order

    # RoPE (incl. the reference's "new-rot in pass" quirk) as a full-width
    # linear combination: out = t*A + swap(t)*B; the half-swap uses the idle
    # MXU via a constant permutation matrix -> no lane slices.
    pswap = pswap_ref[...]
    A = ropeA_ref[...]
    Bc = ropeB_ref[...]
    q = jnp.clip(q * A + jnp.dot(q, pswap, preferred_element_type=f32) * Bc,
                 -100.0, 100.0)
    k = jnp.clip(k * A + jnp.dot(k, pswap, preferred_element_type=f32) * Bc,
                 -100.0, 100.0)
    q = q * attn_scale            # scale q post-clip (exactly equivalent)

    # Block-diagonal "all heads at once" attention: replicate k/v over head
    # blocks along sublanes (tile-aligned copies) and mask to the head's cols.
    k_big = jnp.concatenate([k] * n_head, axis=0) * kmask_ref[...]   # (nH*M, C)
    v_big = jnp.concatenate([v] * n_head, axis=0) * vmask_ref[...]   # (nH*M, C)

    contract_last = (((1,), (1,)), ((), ()))                 # 'mc,rc->mr'
    s = jax.lax.dot_general(q, k_big, contract_last,
                            preferred_element_type=f32)      # (M, nH*M)
    s = s + bias_ref[...]                                    # causal+batch 0/-1e30

    # Per-head softmax: global row max is exact (constant per row cancels
    # within each head block); denominators via one block-diagonal-ones matmul.
    m = jnp.max(s, axis=-1, keepdims=True)
    p = jnp.exp(s - m)
    denom = jnp.dot(p, dblock_ref[...], preferred_element_type=f32)  # (M, nH*M)
    p = p * pl.reciprocal(denom, approx=True)

    # PV + output projection; v_big's natural-order head mask makes this the
    # concatenated head output directly.
    y_cat = jnp.dot(p, v_big, preferred_element_type=f32)    # (M, C)
    y = jnp.dot(y_cat, wproj_ref[...], preferred_element_type=f32)
    x = x + resid_scale * y

    # ---------------- MLP branch (SwiGLU), fused up|gate matmul --------------
    h2 = _layer_norm(x, ln2_ref[...])
    ug = jnp.dot(h2, wupgate_ref[...], preferred_element_type=f32)   # (M, 8C)
    up = ug[:, :H4]                       # lane-tile aligned split (4C = 128)
    gate = ug[:, H4:]
    gate = gate * jax.nn.sigmoid(gate)    # SiLU
    mlp_out = jnp.dot(up * gate, wdown_ref[...], preferred_element_type=f32)

    # TODO(synk): dropout layers are identity (dropout=0 / eval mode); the
    # reference's isnan warnings / nan_to_num guards are omitted.
    out_ref[...] = x + resid_scale * mlp_out


# ----------------------------------------------------------------------------
# Wrapper
# ----------------------------------------------------------------------------
def block_forward(x, params, *, n_head, n_layer):
    B, T, C = x.shape
    hs = C // n_head
    M = B * T
    resid_scale = 1.0 / math.sqrt(2 * n_layer)

    (ln1_w, ln2_w, wq, wk, wv, wproj, pswap, ropeA, ropeB,
     kmask, vmask, bias, dblock, wupgate, wdown) = params

    x2d = x.reshape(M, C)

    kernel = functools.partial(block_kernel, n_head=n_head, head_size=hs,
                               resid_scale=resid_scale)

    full = lambda shape: pl.BlockSpec(shape, lambda i: (0, 0))

    grid_spec = pltpu.PrefetchScalarGridSpec(
        num_scalar_prefetch=0,
        grid=(1,),
        in_specs=[
            full((M, C)),                        # x (B*T, C)
            full((1, C)), full((1, C)),          # ln1, ln2 weights
            full((C, C)), full((C, C)),          # Wq_perm, Wk_perm (in, out)
            full((C, C)), full((C, C)),          # Wv, Wproj (in, out)
            full((C, C)),                        # half-swap permutation matrix
            full((M, C)), full((M, C)),          # RoPE A, B coefficients
            full((n_head * M, C)),               # q/k head mask (permuted cols)
            full((n_head * M, C)),               # v head mask (natural cols)
            full((M, n_head * M)),               # causal+batch additive bias
            full((n_head * M, n_head * M)),      # block-diagonal ones (softmax denom)
            full((C, 8 * C)),                    # fused up|gate weight
            full((4 * C, C)),                    # down proj weight
        ],
        out_specs=full((M, C)),
    )

    out2d = pl.pallas_call(
        kernel,
        out_shape=jax.ShapeDtypeStruct((M, C), jnp.float32),
        grid_spec=grid_spec,
        compiler_params=pltpu.CompilerParams(
            dimension_semantics=("arbitrary",)),
    )(x2d, ln1_w, ln2_w, wq, wk, wv, wproj, pswap, ropeA, ropeB,
      kmask, vmask, bias, dblock, wupgate, wdown)

    return out2d.reshape(B, T, C)


# ----------------------------------------------------------------------------
# Pure-JAX reference (mirrors the PyTorch forward exactly) for validation.
# ----------------------------------------------------------------------------
def block_reference(x, torch_params, *, n_head, n_layer):
    (ln1_w, ln2_w, w_attn, w_proj, w_up, w_gate, w_down, cos, sin) = torch_params
    B, T, C = x.shape
    hs = C // n_head
    resid_scale = 1.0 / math.sqrt(2 * n_layer)

    def ln(h, w):
        mu = h.mean(-1, keepdims=True)
        var = ((h - mu) ** 2).mean(-1, keepdims=True)
        return (h - mu) / jnp.sqrt(var + 1e-5) * w

    def rope(t):
        xe, xo = t[..., 0::2], t[..., 1::2]
        c = cos[None, None]
        s = sin[None, None]
        nr = xe * c - xo * s
        npp = xo * c + nr * s
        return jnp.stack([nr, npp], axis=-1).reshape(t.shape)

    h = ln(x, ln1_w)
    qkv = h @ w_attn.T
    q, k, v = jnp.split(qkv, 3, axis=-1)
    q = q.reshape(B, T, n_head, hs).transpose(0, 2, 1, 3)
    k = k.reshape(B, T, n_head, hs).transpose(0, 2, 1, 3)
    v = v.reshape(B, T, n_head, hs).transpose(0, 2, 1, 3)
    q = jnp.clip(rope(q), -100, 100)
    k = jnp.clip(rope(k), -100, 100)
    v = jnp.clip(v, -100, 100)

    att = jnp.einsum('bhtd,bhsd->bhts', q, k) / math.sqrt(hs)
    mask = jnp.tril(jnp.ones((T, T), dtype=bool))
    att = jnp.where(mask, att, -jnp.inf)
    att = jax.nn.softmax(att, axis=-1)
    y = jnp.einsum('bhts,bhsd->bhtd', att, v)
    y = y.transpose(0, 2, 1, 3).reshape(B, T, C)
    y = y @ w_proj.T
    x = x + resid_scale * y

    h2 = ln(x, ln2_w)
    up = h2 @ w_up.T
    gate = jax.nn.silu(h2 @ w_gate.T)
    mlp = (up * gate) @ w_down.T
    return x + resid_scale * mlp


# ----------------------------------------------------------------------------
# Main
# ----------------------------------------------------------------------------
if __name__ == "__main__":
    B, T, C = 2, 8, 32
    n_head, n_layer = 4, 2
    hs = C // n_head
    hs2 = hs // 2
    C2 = C // 2
    M = B * T
    std = 0.02

    key = jax.random.PRNGKey(0)
    ks = jax.random.split(key, 6)

    # PyTorch-convention weights (out_features, in_features), bias=False.
    w_attn = std * jax.random.normal(ks[0], (3 * C, C), jnp.float32)
    w_proj = (std / math.sqrt(2 * n_layer)) * jax.random.normal(ks[1], (C, C), jnp.float32)
    w_up = std * jax.random.normal(ks[2], (4 * C, C), jnp.float32)
    w_gate = std * jax.random.normal(ks[3], (4 * C, C), jnp.float32)
    w_down = (std / math.sqrt(2 * n_layer)) * jax.random.normal(ks[4], (C, 4 * C), jnp.float32)
    ln1_w = jnp.ones((C,), jnp.float32)
    ln2_w = jnp.ones((C,), jnp.float32)

    x = jax.random.normal(ks[5], (B, T, C), jnp.float32)

    # RoPE cache (positions 0..T-1 of precompute_rope_cache).
    pos = jnp.arange(T, dtype=jnp.float32)
    dim_pos = jnp.arange(0, hs, 2, dtype=jnp.float32)
    freq = 1.0 / (10000.0 ** (dim_pos / hs))
    angles = pos[:, None] * freq[None, :]                 # (T, hs/2)
    cos, sin = jnp.cos(angles), jnp.sin(angles)

    # ---- kernel-side parameter prep (glue, all precomputed on host/XLA) ----
    # Global q/k column permutation: [all-heads even dims | all-heads odd dims].
    evens = (jnp.arange(n_head)[:, None] * hs + jnp.arange(0, hs, 2)[None, :]).reshape(-1)
    odds = (jnp.arange(n_head)[:, None] * hs + jnp.arange(1, hs, 2)[None, :]).reshape(-1)
    perm = jnp.concatenate([evens, odds])

    wq = w_attn[:C, :].T[:, perm]           # (C, C), in -> permuted out
    wk = w_attn[C:2 * C, :].T[:, perm]
    wv = w_attn[2 * C:, :].T                # natural head order

    # Half-swap permutation matrix: (t @ pswap)[c] = t[(c +/- C/2) mod C].
    idx = jnp.arange(C)
    pswap = (idx[None, :] == ((idx[:, None] + C2) % C)).astype(jnp.float32)

    # RoPE coefficients in the permuted [even | odd] layout.  For even lanes:
    # out = e*cos + o*(-sin); for odd lanes (ref quirk uses NEW rot):
    # out = e*(cos*sin) + o*(cos - sin^2).
    cos_full = jnp.tile(cos, (B, n_head)).astype(jnp.float32)   # (M, C/2)
    sin_full = jnp.tile(sin, (B, n_head)).astype(jnp.float32)
    ropeA = jnp.concatenate([cos_full, cos_full - sin_full ** 2], axis=1)   # (M, C)
    ropeB = jnp.concatenate([-sin_full, cos_full * sin_full], axis=1)       # (M, C)

    # Head masks for the block-diagonal formulation.
    col_head_perm = (jnp.arange(C) % C2) // hs2       # head owning permuted col
    col_head_nat = jnp.arange(C) // hs                # head owning natural col
    row_head = jnp.repeat(jnp.arange(n_head), M)      # (n_head*M,)
    kmask = (row_head[:, None] == col_head_perm[None, :]).astype(jnp.float32)
    vmask = (row_head[:, None] == col_head_nat[None, :]).astype(jnp.float32)

    # Additive attention bias: same-batch AND causal -> 0, else -1e30;
    # tiled over the n_head column blocks.
    r = jnp.arange(M)
    allowed = ((r[:, None] // T) == (r[None, :] // T)) & (r[:, None] >= r[None, :])
    bias_small = jnp.where(allowed, 0.0, -1e30).astype(jnp.float32)  # (M, M)
    bias = jnp.tile(bias_small, (1, n_head))                         # (M, nH*M)

    # Block-diagonal ones matrix for per-head softmax denominators.
    rr = jnp.arange(n_head * M)
    dblock = ((rr[:, None] // M) == (rr[None, :] // M)).astype(jnp.float32)

    # Fused up|gate weight (C, 8C); down proj transposed (4C, C).
    wupgate = jnp.concatenate([w_up.T, w_gate.T], axis=1)

    kernel_params = (ln1_w.reshape(1, C), ln2_w.reshape(1, C),
                     wq, wk, wv, w_proj.T, pswap, ropeA, ropeB,
                     kmask, vmask, bias, dblock, wupgate, w_down.T)

    out = block_forward(x, kernel_params, n_head=n_head, n_layer=n_layer)
    out = jax.block_until_ready(out)

    ref = block_reference(
        x, (ln1_w, ln2_w, w_attn, w_proj, w_up, w_gate, w_down, cos, sin),
        n_head=n_head, n_layer=n_layer)
    ref = jax.block_until_ready(ref)

    assert out.shape == (B, T, C) and out.dtype == jnp.float32
    assert jnp.allclose(out, ref, rtol=2e-3, atol=2e-3), \
        f"max abs err {jnp.max(jnp.abs(out - ref))}"

    print("KERNEL_OK")
</pallas_src>

<mosaic_0001>
module attributes {stable_mosaic.version = 11 : i64} {
  func.func @block_kernel(%arg0: i32, %arg1: memref<16x32xf32, #tpu.memory_space<vmem>>, %arg2: memref<1x32xf32, #tpu.memory_space<vmem>>, %arg3: memref<1x32xf32, #tpu.memory_space<vmem>>, %arg4: memref<32x32xf32, #tpu.memory_space<vmem>>, %arg5: memref<32x32xf32, #tpu.memory_space<vmem>>, %arg6: memref<32x32xf32, #tpu.memory_space<vmem>>, %arg7: memref<32x32xf32, #tpu.memory_space<vmem>>, %arg8: memref<32x32xf32, #tpu.memory_space<vmem>>, %arg9: memref<16x32xf32, #tpu.memory_space<vmem>>, %arg10: memref<16x32xf32, #tpu.memory_space<vmem>>, %arg11: memref<64x32xf32, #tpu.memory_space<vmem>>, %arg12: memref<64x32xf32, #tpu.memory_space<vmem>>, %arg13: memref<16x64xf32, #tpu.memory_space<vmem>>, %arg14: memref<64x64xf32, #tpu.memory_space<vmem>>, %arg15: memref<32x256xf32, #tpu.memory_space<vmem>>, %arg16: memref<128x32xf32, #tpu.memory_space<vmem>>, %arg17: memref<16x32xf32, #tpu.memory_space<vmem>>) attributes {dimension_semantics = [#tpu.dimension_semantics<arbitrary>], iteration_bounds = array<i64: 1>, scalar_prefetch = 0 : i64, scratch_operands = 0 : i64, tpu.core_type = #tpu.core_type<tc>, window_params = [{pipeline_mode = #tpu.pipeline_mode<synchronous>, transform_indices = @transform_0, window_bounds = array<i64: 16, 32>}, {pipeline_mode = #tpu.pipeline_mode<synchronous>, transform_indices = @transform_1, window_bounds = array<i64: 1, 32>}, {pipeline_mode = #tpu.pipeline_mode<synchronous>, transform_indices = @transform_2, window_bounds = array<i64: 1, 32>}, {pipeline_mode = #tpu.pipeline_mode<synchronous>, transform_indices = @transform_3, window_bounds = array<i64: 32, 32>}, {pipeline_mode = #tpu.pipeline_mode<synchronous>, transform_indices = @transform_4, window_bounds = array<i64: 32, 32>}, {pipeline_mode = #tpu.pipeline_mode<synchronous>, transform_indices = @transform_5, window_bounds = array<i64: 32, 32>}, {pipeline_mode = #tpu.pipeline_mode<synchronous>, transform_indices = @transform_6, window_bounds = array<i64: 32, 32>}, {pipeline_mode = #tpu.pipeline_mode<synchronous>, transform_indices = @transform_7, window_bounds = array<i64: 32, 32>}, {pipeline_mode = #tpu.pipeline_mode<synchronous>, transform_indices = @transform_8, window_bounds = array<i64: 16, 32>}, {pipeline_mode = #tpu.pipeline_mode<synchronous>, transform_indices = @transform_9, window_bounds = array<i64: 16, 32>}, {pipeline_mode = #tpu.pipeline_mode<synchronous>, transform_indices = @transform_10, window_bounds = array<i64: 64, 32>}, {pipeline_mode = #tpu.pipeline_mode<synchronous>, transform_indices = @transform_11, window_bounds = array<i64: 64, 32>}, {pipeline_mode = #tpu.pipeline_mode<synchronous>, transform_indices = @transform_12, window_bounds = array<i64: 16, 64>}, {pipeline_mode = #tpu.pipeline_mode<synchronous>, transform_indices = @transform_13, window_bounds = array<i64: 64, 64>}, {pipeline_mode = #tpu.pipeline_mode<synchronous>, transform_indices = @transform_14, window_bounds = array<i64: 32, 256>}, {pipeline_mode = #tpu.pipeline_mode<synchronous>, transform_indices = @transform_15, window_bounds = array<i64: 128, 32>}, {pipeline_mode = #tpu.pipeline_mode<synchronous>, transform_indices = @transform_16, window_bounds = array<i64: 16, 32>}]} {
    %c0 = arith.constant 0 : index
    %c0_0 = arith.constant 0 : index
    %0 = vector.load %arg1[%c0, %c0_0] : memref<16x32xf32, #tpu.memory_space<vmem>>, vector<16x32xf32>
    %c0_1 = arith.constant 0 : index
    %c0_2 = arith.constant 0 : index
    %1 = vector.load %arg2[%c0_1, %c0_2] : memref<1x32xf32, #tpu.memory_space<vmem>>, vector<1x32xf32>
    %cst = arith.constant dense<0.000000e+00> : vector<16xf32>
    %2 = vector.multi_reduction <add>, %0, %cst [1] : vector<16x32xf32> to vector<16xf32>
    %3 = vector.shape_cast %2 : vector<16xf32> to vector<16x1xf32>
    %cst_3 = arith.constant 3.200000e+01 : f32
    %4 = vector.broadcast %cst_3 : f32 to vector<16x1xf32>
    %5 = arith.divf %3, %4 : vector<16x1xf32>
    %6 = arith.mulf %0, %0 : vector<16x32xf32>
    %cst_4 = arith.constant dense<0.000000e+00> : vector<16xf32>
    %7 = vector.multi_reduction <add>, %6, %cst_4 [1] : vector<16x32xf32> to vector<16xf32>
    %8 = vector.shape_cast %7 : vector<16xf32> to vector<16x1xf32>
    %cst_5 = arith.constant 3.200000e+01 : f32
    %9 = vector.broadcast %cst_5 : f32 to vector<16x1xf32>
    %10 = arith.divf %8, %9 : vector<16x1xf32>
    %11 = arith.mulf %5, %5 : vector<16x1xf32>
    %12 = arith.subf %10, %11 : vector<16x1xf32>
    %13 = vector.broadcast %5 : vector<16x1xf32> to vector<16x32xf32>
    %14 = arith.subf %0, %13 : vector<16x32xf32>
    %cst_6 = arith.constant 9.99999974E-6 : f32
    %15 = vector.broadcast %cst_6 : f32 to vector<16x1xf32>
    %16 = arith.addf %12, %15 : vector<16x1xf32>
    %17 = math.rsqrt %16 : vector<16x1xf32>
    %18 = vector.broadcast %17 : vector<16x1xf32> to vector<16x32xf32>
    %19 = arith.mulf %14, %18 : vector<16x32xf32>
    %20 = vector.broadcast %1 : vector<1x32xf32> to vector<16x32xf32>
    %21 = arith.mulf %19, %20 : vector<16x32xf32>
    %c0_7 = arith.constant 0 : index
    %c0_8 = arith.constant 0 : index
    %22 = vector.load %arg4[%c0_7, %c0_8] : memref<32x32xf32, #tpu.memory_space<vmem>>, vector<32x32xf32>
    %cst_9 = arith.constant dense<0.000000e+00> : vector<16x32xf32>
    %23 = tpu.matmul %21, %22, %cst_9 {dimension_numbers = #tpu.dot_dimension_numbers<[1], [0], [0], [1], [0, 0, 1, 1], [], []>} : vector<16x32xf32>, vector<32x32xf32>, vector<16x32xf32> -> vector<16x32xf32>
    %c0_10 = arith.constant 0 : index
    %c0_11 = arith.constant 0 : index
    %24 = vector.load %arg5[%c0_10, %c0_11] : memref<32x32xf32, #tpu.memory_space<vmem>>, vector<32x32xf32>
    %cst_12 = arith.constant dense<0.000000e+00> : vector<16x32xf32>
    %25 = tpu.matmul %21, %24, %cst_12 {dimension_numbers = #tpu.dot_dimension_numbers<[1], [0], [0], [1], [0, 0, 1, 1], [], []>} : vector<16x32xf32>, vector<32x32xf32>, vector<16x32xf32> -> vector<16x32xf32>
    %c0_13 = arith.constant 0 : index
    %c0_14 = arith.constant 0 : index
    %26 = vector.load %arg6[%c0_13, %c0_14] : memref<32x32xf32, #tpu.memory_space<vmem>>, vector<32x32xf32>
    %cst_15 = arith.constant dense<0.000000e+00> : vector<16x32xf32>
    %27 = tpu.matmul %21, %26, %cst_15 {dimension_numbers = #tpu.dot_dimension_numbers<[1], [0], [0], [1], [0, 0, 1, 1], [], []>} : vector<16x32xf32>, vector<32x32xf32>, vector<16x32xf32> -> vector<16x32xf32>
    %cst_16 = arith.constant -1.000000e+02 : f32
    %cst_17 = arith.constant 1.000000e+02 : f32
    %28 = vector.broadcast %cst_16 : f32 to vector<16x32xf32>
    %29 = arith.maximumf %28, %27 : vector<16x32xf32>
    %30 = vector.broadcast %cst_17 : f32 to vector<16x32xf32>
    %31 = arith.minimumf %30, %29 : vector<16x32xf32>
    %c0_18 = arith.constant 0 : index
    %c0_19 = arith.constant 0 : index
    %32 = vector.load %arg8[%c0_18, %c0_19] : memref<32x32xf32, #tpu.memory_space<vmem>>, vector<32x32xf32>
    %c0_20 = arith.constant 0 : index
    %c0_21 = arith.constant 0 : index
    %33 = vector.load %arg9[%c0_20, %c0_21] : memref<16x32xf32, #tpu.memory_space<vmem>>, vector<16x32xf32>
    %c0_22 = arith.constant 0 : index
    %c0_23 = arith.constant 0 : index
    %34 = vector.load %arg10[%c0_22, %c0_23] : memref<16x32xf32, #tpu.memory_space<vmem>>, vector<16x32xf32>
    %35 = arith.mulf %23, %33 : vector<16x32xf32>
    %cst_24 = arith.constant dense<0.000000e+00> : vector<16x32xf32>
    %36 = tpu.matmul %23, %32, %cst_24 {dimension_numbers = #tpu.dot_dimension_numbers<[1], [0], [0], [1], [0, 0, 1, 1], [], []>} : vector<16x32xf32>, vector<32x32xf32>, vector<16x32xf32> -> vector<16x32xf32>
    %37 = arith.mulf %36, %34 : vector<16x32xf32>
    %38 = arith.addf %35, %37 : vector<16x32xf32>
    %cst_25 = arith.constant -1.000000e+02 : f32
    %cst_26 = arith.constant 1.000000e+02 : f32
    %39 = vector.broadcast %cst_25 : f32 to vector<16x32xf32>
    %40 = arith.maximumf %39, %38 : vector<16x32xf32>
    %41 = vector.broadcast %cst_26 : f32 to vector<16x32xf32>
    %42 = arith.minimumf %41, %40 : vector<16x32xf32>
    %43 = arith.mulf %25, %33 : vector<16x32xf32>
    %cst_27 = arith.constant dense<0.000000e+00> : vector<16x32xf32>
    %44 = tpu.matmul %25, %32, %cst_27 {dimension_numbers = #tpu.dot_dimension_numbers<[1], [0], [0], [1], [0, 0, 1, 1], [], []>} : vector<16x32xf32>, vector<32x32xf32>, vector<16x32xf32> -> vector<16x32xf32>
    %45 = arith.mulf %44, %34 : vector<16x32xf32>
    %46 = arith.addf %43, %45 : vector<16x32xf32>
    %cst_28 = arith.constant -1.000000e+02 : f32
    %cst_29 = arith.constant 1.000000e+02 : f32
    %47 = vector.broadcast %cst_28 : f32 to vector<16x32xf32>
    %48 = arith.maximumf %47, %46 : vector<16x32xf32>
    %49 = vector.broadcast %cst_29 : f32 to vector<16x32xf32>
    %50 = arith.minimumf %49, %48 : vector<16x32xf32>
    %cst_30 = arith.constant 0.353553385 : f32
    %51 = vector.broadcast %cst_30 : f32 to vector<16x32xf32>
    %52 = arith.mulf %42, %51 : vector<16x32xf32>
    %53 = tpu.concatenate %50, %50, %50, %50 in 0 : vector<16x32xf32>, vector<16x32xf32>, vector<16x32xf32>, vector<16x32xf32> -> vector<64x32xf32>
    %c0_31 = arith.constant 0 : index
    %c0_32 = arith.constant 0 : index
    %54 = vector.load %arg11[%c0_31, %c0_32] : memref<64x32xf32, #tpu.memory_space<vmem>>, vector<64x32xf32>
    %55 = arith.mulf %53, %54 : vector<64x32xf32>
    %56 = tpu.concatenate %31, %31, %31, %31 in 0 : vector<16x32xf32>, vector<16x32xf32>, vector<16x32xf32>, vector<16x32xf32> -> vector<64x32xf32>
    %c0_33 = arith.constant 0 : index
    %c0_34 = arith.constant 0 : index
    %57 = vector.load %arg12[%c0_33, %c0_34] : memref<64x32xf32, #tpu.memory_space<vmem>>, vector<64x32xf32>
    %58 = arith.mulf %56, %57 : vector<64x32xf32>
    %cst_35 = arith.constant dense<0.000000e+00> : vector<16x64xf32>
    %59 = tpu.matmul %52, %55, %cst_35 {dimension_numbers = #tpu.dot_dimension_numbers<[1], [1], [0], [0], [0, 0, 1, 0], [], []>} : vector<16x32xf32>, vector<64x32xf32>, vector<16x64xf32> -> vector<16x64xf32>
    %c0_36 = arith.constant 0 : index
    %c0_37 = arith.constant 0 : index
    %60 = vector.load %arg13[%c0_36, %c0_37] : memref<16x64xf32, #tpu.memory_space<vmem>>, vector<16x64xf32>
    %61 = arith.addf %59, %60 : vector<16x64xf32>
    %cst_38 = arith.constant dense<0xFF800000> : vector<16xf32>
    %62 = vector.multi_reduction <maximumf>, %61, %cst_38 [1] : vector<16x64xf32> to vector<16xf32>
    %63 = vector.shape_cast %62 : vector<16xf32> to vector<16x1xf32>
    %64 = vector.broadcast %63 : vector<16x1xf32> to vector<16x64xf32>
    %65 = arith.subf %61, %64 : vector<16x64xf32>
    %66 = math.exp %65 : vector<16x64xf32>
    %c0_39 = arith.constant 0 : index
    %c0_40 = arith.constant 0 : index
    %67 = vector.load %arg14[%c0_39, %c0_40] : memref<64x64xf32, #tpu.memory_space<vmem>>, vector<64x64xf32>
    %cst_41 = arith.constant dense<0.000000e+00> : vector<16x64xf32>
    %68 = tpu.matmul %66, %67, %cst_41 {dimension_numbers = #tpu.dot_dimension_numbers<[1], [0], [0], [1], [0, 0, 1, 1], [], []>} : vector<16x64xf32>, vector<64x64xf32>, vector<16x64xf32> -> vector<16x64xf32>
    %69 = tpu.reciprocal %68 {approx = true} : vector<16x64xf32> -> vector<16x64xf32>
    %70 = arith.mulf %66, %69 : vector<16x64xf32>
    %cst_42 = arith.constant dense<0.000000e+00> : vector<16x32xf32>
    %71 = tpu.matmul %70, %58, %cst_42 {dimension_numbers = #tpu.dot_dimension_numbers<[1], [0], [0], [1], [0, 0, 1, 1], [], []>} : vector<16x64xf32>, vector<64x32xf32>, vector<16x32xf32> -> vector<16x32xf32>
    %c0_43 = arith.constant 0 : index
    %c0_44 = arith.constant 0 : index
    %72 = vector.load %arg7[%c0_43, %c0_44] : memref<32x32xf32, #tpu.memory_space<vmem>>, vector<32x32xf32>
    %cst_45 = arith.constant dense<0.000000e+00> : vector<16x32xf32>
    %73 = tpu.matmul %71, %72, %cst_45 {dimension_numbers = #tpu.dot_dimension_numbers<[1], [0], [0], [1], [0, 0, 1, 1], [], []>} : vector<16x32xf32>, vector<32x32xf32>, vector<16x32xf32> -> vector<16x32xf32>
    %cst_46 = arith.constant 5.000000e-01 : f32
    %74 = vector.broadcast %cst_46 : f32 to vector<16x32xf32>
    %75 = arith.mulf %74, %73 : vector<16x32xf32>
    %76 = arith.addf %0, %75 : vector<16x32xf32>
    %c0_47 = arith.constant 0 : index
    %c0_48 = arith.constant 0 : index
    %77 = vector.load %arg3[%c0_47, %c0_48] : memref<1x32xf32, #tpu.memory_space<vmem>>, vector<1x32xf32>
    %cst_49 = arith.constant dense<0.000000e+00> : vector<16xf32>
    %78 = vector.multi_reduction <add>, %76, %cst_49 [1] : vector<16x32xf32> to vector<16xf32>
    %79 = vector.shape_cast %78 : vector<16xf32> to vector<16x1xf32>
    %cst_50 = arith.constant 3.200000e+01 : f32
    %80 = vector.broadcast %cst_50 : f32 to vector<16x1xf32>
    %81 = arith.divf %79, %80 : vector<16x1xf32>
    %82 = arith.mulf %76, %76 : vector<16x32xf32>
    %cst_51 = arith.constant dense<0.000000e+00> : vector<16xf32>
    %83 = vector.multi_reduction <add>, %82, %cst_51 [1] : vector<16x32xf32> to vector<16xf32>
    %84 = vector.shape_cast %83 : vector<16xf32> to vector<16x1xf32>
    %cst_52 = arith.constant 3.200000e+01 : f32
    %85 = vector.broadcast %cst_52 : f32 to vector<16x1xf32>
    %86 = arith.divf %84, %85 : vector<16x1xf32>
    %87 = arith.mulf %81, %81 : vector<16x1xf32>
    %88 = arith.subf %86, %87 : vector<16x1xf32>
    %89 = vector.broadcast %81 : vector<16x1xf32> to vector<16x32xf32>
    %90 = arith.subf %76, %89 : vector<16x32xf32>
    %cst_53 = arith.constant 9.99999974E-6 : f32
    %91 = vector.broadcast %cst_53 : f32 to vector<16x1xf32>
    %92 = arith.addf %88, %91 : vector<16x1xf32>
    %93 = math.rsqrt %92 : vector<16x1xf32>
    %94 = vector.broadcast %93 : vector<16x1xf32> to vector<16x32xf32>
    %95 = arith.mulf %90, %94 : vector<16x32xf32>
    %96 = vector.broadcast %77 : vector<1x32xf32> to vector<16x32xf32>
    %97 = arith.mulf %95, %96 : vector<16x32xf32>
    %c0_54 = arith.constant 0 : index
    %c0_55 = arith.constant 0 : index
    %98 = vector.load %arg15[%c0_54, %c0_55] : memref<32x256xf32, #tpu.memory_space<vmem>>, vector<32x256xf32>
    %cst_56 = arith.constant dense<0.000000e+00> : vector<16x256xf32>
    %99 = tpu.matmul %97, %98, %cst_56 {dimension_numbers = #tpu.dot_dimension_numbers<[1], [0], [0], [1], [0, 0, 1, 1], [], []>} : vector<16x32xf32>, vector<32x256xf32>, vector<16x256xf32> -> vector<16x256xf32>
    %100 = vector.extract_strided_slice %99 {offsets = [0, 0], sizes = [16, 128], strides = [1, 1]} : vector<16x256xf32> to vector<16x128xf32>
    %101 = vector.extract_strided_slice %99 {offsets = [0, 128], sizes = [16, 128], strides = [1, 1]} : vector<16x256xf32> to vector<16x128xf32>
    %102 = arith.negf %101 : vector<16x128xf32>
    %103 = math.exp %102 : vector<16x128xf32>
    %cst_57 = arith.constant 1.000000e+00 : f32
    %104 = vector.broadcast %cst_57 : f32 to vector<16x128xf32>
    %105 = arith.addf %104, %103 : vector<16x128xf32>
    %106 = arith.divf %104, %105 : vector<16x128xf32>
    %107 = arith.mulf %101, %106 : vector<16x128xf32>
    %108 = arith.mulf %100, %107 : vector<16x128xf32>
    %c0_58 = arith.constant 0 : index
    %c0_59 = arith.constant 0 : index
    %109 = vector.load %arg16[%c0_58, %c0_59] : memref<128x32xf32, #tpu.memory_space<vmem>>, vector<128x32xf32>
    %cst_60 = arith.constant dense<0.000000e+00> : vector<16x32xf32>
    %110 = tpu.matmul %108, %109, %cst_60 {dimension_numbers = #tpu.dot_dimension_numbers<[1], [0], [0], [1], [0, 0, 1, 1], [], []>} : vector<16x128xf32>, vector<128x32xf32>, vector<16x32xf32> -> vector<16x32xf32>
    %cst_61 = arith.constant 5.000000e-01 : f32
    %111 = vector.broadcast %cst_61 : f32 to vector<16x32xf32>
    %112 = arith.mulf %111, %110 : vector<16x32xf32>
    %113 = arith.addf %76, %112 : vector<16x32xf32>
    %c0_62 = arith.constant 0 : index
    %c0_63 = arith.constant 0 : index
    %114 = vector.load %arg17[%c0_62, %c0_63] : memref<16x32xf32, #tpu.memory_space<vmem>>, vector<16x32xf32>
    tpu.vector_store %arg17[%c0_62, %c0_63], %113 {strides = array<i32>} : memref<16x32xf32, #tpu.memory_space<vmem>>, vector<16x32xf32>,
    return
  }
  func.func @transform_0(%arg0: i32) -> (i32, i32) {
    %c0_i32 = arith.constant 0 : i32
    %c0_i32_0 = arith.constant 0 : i32
    %c0_i32_1 = arith.constant 0 : i32
    return %c0_i32, %c0_i32_0 : i32, i32
  }
  func.func @transform_1(%arg0: i32) -> (i32, i32) {
    %c0_i32 = arith.constant 0 : i32
    %c0_i32_0 = arith.constant 0 : i32
    %c0_i32_1 = arith.constant 0 : i32
    return %c0_i32, %c0_i32_0 : i32, i32
  }
  func.func @transform_2(%arg0: i32) -> (i32, i32) {
    %c0_i32 = arith.constant 0 : i32
    %c0_i32_0 = arith.constant 0 : i32
    %c0_i32_1 = arith.constant 0 : i32
    return %c0_i32, %c0_i32_0 : i32, i32
  }
  func.func @transform_3(%arg0: i32) -> (i32, i32) {
    %c0_i32 = arith.constant 0 : i32
    %c0_i32_0 = arith.constant 0 : i32
    %c0_i32_1 = arith.constant 0 : i32
    return %c0_i32, %c0_i32_0 : i32, i32
  }
  func.func @transform_4(%arg0: i32) -> (i32, i32) {
    %c0_i32 = arith.constant 0 : i32
    %c0_i32_0 = arith.constant 0 : i32
    %c0_i32_1 = arith.constant 0 : i32
    return %c0_i32, %c0_i32_0 : i32, i32
  }
  func.func @transform_5(%arg0: i32) -> (i32, i32) {
    %c0_i32 = arith.constant 0 : i32
    %c0_i32_0 = arith.constant 0 : i32
    %c0_i32_1 = arith.constant 0 : i32
    return %c0_i32, %c0_i32_0 : i32, i32
  }
  func.func @transform_6(%arg0: i32) -> (i32, i32) {
    %c0_i32 = arith.constant 0 : i32
    %c0_i32_0 = arith.constant 0 : i32
    %c0_i32_1 = arith.constant 0 : i32
    return %c0_i32, %c0_i32_0 : i32, i32
  }
  func.func @transform_7(%arg0: i32) -> (i32, i32) {
    %c0_i32 = arith.constant 0 : i32
    %c0_i32_0 = arith.constant 0 : i32
    %c0_i32_1 = arith.constant 0 : i32
    return %c0_i32, %c0_i32_0 : i32, i32
  }
  func.func @transform_8(%arg0: i32) -> (i32, i32) {
    %c0_i32 = arith.constant 0 : i32
    %c0_i32_0 = arith.constant 0 : i32
    %c0_i32_1 = arith.constant 0 : i32
    return %c0_i32, %c0_i32_0 : i32, i32
  }
  func.func @transform_9(%arg0: i32) -> (i32, i32) {
    %c0_i32 = arith.constant 0 : i32
    %c0_i32_0 = arith.constant 0 : i32
    %c0_i32_1 = arith.constant 0 : i32
    return %c0_i32, %c0_i32_0 : i32, i32
  }
  func.func @transform_10(%arg0: i32) -> (i32, i32) {
    %c0_i32 = arith.constant 0 : i32
    %c0_i32_0 = arith.constant 0 : i32
    %c0_i32_1 = arith.constant 0 : i32
    return %c0_i32, %c0_i32_0 : i32, i32
  }
  func.func @transform_11(%arg0: i32) -> (i32, i32) {
    %c0_i32 = arith.constant 0 : i32
    %c0_i32_0 = arith.constant 0 : i32
    %c0_i32_1 = arith.constant 0 : i32
    return %c0_i32, %c0_i32_0 : i32, i32
  }
  func.func @transform_12(%arg0: i32) -> (i32, i32) {
    %c0_i32 = arith.constant 0 : i32
    %c0_i32_0 = arith.constant 0 : i32
    %c0_i32_1 = arith.constant 0 : i32
    return %c0_i32, %c0_i32_0 : i32, i32
  }
  func.func @transform_13(%arg0: i32) -> (i32, i32) {
    %c0_i32 = arith.constant 0 : i32
    %c0_i32_0 = arith.constant 0 : i32
    %c0_i32_1 = arith.constant 0 : i32
    return %c0_i32, %c0_i32_0 : i32, i32
  }
  func.func @transform_14(%arg0: i32) -> (i32, i32) {
    %c0_i32 = arith.constant 0 : i32
    %c0_i32_0 = arith.constant 0 : i32
    %c0_i32_1 = arith.constant 0 : i32
    return %c0_i32, %c0_i32_0 : i32, i32
  }
  func.func @transform_15(%arg0: i32) -> (i32, i32) {
    %c0_i32 = arith.constant 0 : i32
    %c0_i32_0 = arith.constant 0 : i32
    %c0_i32_1 = arith.constant 0 : i32
    return %c0_i32, %c0_i32_0 : i32, i32
  }
  func.func @transform_16(%arg0: i32) -> (i32, i32) {
    %c0_i32 = arith.constant 0 : i32
    %c0_i32_0 = arith.constant 0 : i32
    %c0_i32_1 = arith.constant 0 : i32
    return %c0_i32, %c0_i32_0 : i32, i32
  }
}

</mosaic_0001>

<llo_original>
// kernel: tpu_custom_call.1
$region0: #{tpu_custom_call.1}
  #allocation0 [shape = 'u32[]', space=smem, size = 0x4, offset = 0x4, fixed_abs, tag = 'smem constant byte address 0x4 - core index']
  #allocation1 [shape = 'u32[144,128]{1,0:T(1,128)}', space=vmem, size = 0x12000, scoped, tag = 'internal scratch']
  %s0 = inlined_call_operand.hbm [shape: f32[16,32], index: 0, kind: input, shape index: {}]
  %s1 = inlined_call_operand.vmem [shape: f32[1,32], index: 1, kind: input, shape index: {}]
  %s2 = inlined_call_operand.vmem [shape: f32[1,32], index: 2, kind: input, shape index: {}]
  %s3 = inlined_call_operand.vmem [shape: f32[32,32], index: 3, kind: input, shape index: {}]
  %s4 = inlined_call_operand.vmem [shape: f32[32,32], index: 4, kind: input, shape index: {}]
  %s5 = inlined_call_operand.vmem [shape: f32[32,32], index: 5, kind: input, shape index: {}]
  %s6 = inlined_call_operand.vmem [shape: f32[32,32], index: 6, kind: input, shape index: {}]
  %s7 = inlined_call_operand.vmem [shape: f32[32,32], index: 7, kind: input, shape index: {}]
  %s8 = inlined_call_operand.hbm [shape: f32[16,32], index: 8, kind: input, shape index: {}]
  %s9 = inlined_call_operand.hbm [shape: f32[16,32], index: 9, kind: input, shape index: {}]
  %s10 = inlined_call_operand.vmem [shape: f32[64,32], index: 10, kind: input, shape index: {}]
  %s11 = inlined_call_operand.vmem [shape: f32[64,32], index: 11, kind: input, shape index: {}]
  %s12 = inlined_call_operand.hbm [shape: f32[16,64], index: 12, kind: input, shape index: {}]
  %s13 = inlined_call_operand.vmem [shape: f32[64,64], index: 13, kind: input, shape index: {}]
  %s14 = inlined_call_operand.vmem [shape: f32[32,256], index: 14, kind: input, shape index: {}]
  %s15 = inlined_call_operand.vmem [shape: f32[128,32], index: 15, kind: input, shape index: {}]
  %s16 = inlined_call_operand.hbm [shape: f32[16,32], index: 16, kind: output, shape index: {}]
  %s17 = sld [smem:[#allocation0]]
  $region90: #{tpu_custom_call.1} parent=0
    _
  %s19 = ssub.s32 1, %s17
  %s20 = scalar_select 0, %s19, %s17
  $region1: #{tpu_custom_call.1} parent=0
    #allocation2 [shape = 'u8[8192]{0}', space=vmem, size = 0x2000, scoped, tag = 'input window, operand 0, single buffered']
    #allocation3 [shape = 's32[1]{0}', space=sflag, size = 0x4, scoped, tag = 'scoped memory for tpu_custom_call.1']
    #allocation4 [shape = 's32[1]{0}', space=sflag, size = 0x4, scoped, tag = 'scoped memory for tpu_custom_call.1']
    #allocation5 [shape = 'u8[8192]{0}', space=vmem, size = 0x2000, scoped, tag = 'input window, operand 8, single buffered']
    #allocation6 [shape = 's32[1]{0}', space=sflag, size = 0x4, scoped, tag = 'scoped memory for tpu_custom_call.1']
    #allocation7 [shape = 'u8[8192]{0}', space=vmem, size = 0x2000, scoped, tag = 'input window, operand 9, single buffered']
    #allocation8 [shape = 'u8[8192]{0}', space=vmem, size = 0x2000, scoped, tag = 'input window, operand 12, single buffered']
    #allocation9 [shape = 's32[1]{0}', space=sflag, size = 0x4, scoped, tag = 'scoped memory for tpu_custom_call.1']
    #allocation10 [shape = 'u8[8192]{0}', space=vmem, size = 0x2000, scoped, tag = 'output window, operand 0, single buffered']
    %21 = vsyncpa [#allocation3], 0
    %22 = vsyncpa [#allocation6], 0
    %23 = vsyncpa [#allocation9], 0
    %24 = vsyncpa [#allocation4], 0
    // Predicated region
    $region2: #{tpu_custom_call.1} parent=1 // pred_check
      _
    $region3: #{tpu_custom_call.1} parent=1 // pred_check_branch
      %26 = sbr.rel (0) target = $region5
    $region4: #{tpu_custom_call.1} parent=1 // pred_region
      %s28 = ssub.s32 256, 256
      %29 = vsyncadd [#allocation3], %s28
      %s30 = sshll.u32 [#allocation2], 4
      %s31 = int_to_ptr.vmem [resolvable:$true] %s30
      %36 = dma.hbm_to_vmem [thread:$0]  %s0, 256, %s31, [#allocation3], 128, 128, 8
    $region5: #{tpu_custom_call.1} parent=1 // pred_fallthru
      _
    // Predicated region
    $region6: #{tpu_custom_call.1} parent=1 // pred_check
      _
    $region7: #{tpu_custom_call.1} parent=1 // pred_check_branch
      %38 = sbr.rel (0) target = $region9
    $region8: #{tpu_custom_call.1} parent=1 // pred_region
      _
    $region9: #{tpu_custom_call.1} parent=1 // pred_fallthru
      _
    // Predicated region
    $region10: #{tpu_custom_call.1} parent=1 // pred_check
      _
    $region11: #{tpu_custom_call.1} parent=1 // pred_check_branch
      %40 = sbr.rel (0) target = $region13
    $region12: #{tpu_custom_call.1} parent=1 // pred_region
      _
    $region13: #{tpu_custom_call.1} parent=1 // pred_fallthru
      _
    // Predicated region
    $region14: #{tpu_custom_call.1} parent=1 // pred_check
      _
    $region15: #{tpu_custom_call.1} parent=1 // pred_check_branch
      %42 = sbr.rel (0) target = $region17
    $region16: #{tpu_custom_call.1} parent=1 // pred_region
      _
    $region17: #{tpu_custom_call.1} parent=1 // pred_fallthru
      _
    // Predicated region
    $region18: #{tpu_custom_call.1} parent=1 // pred_check
      _
    $region19: #{tpu_custom_call.1} parent=1 // pred_check_branch
      %44 = sbr.rel (0) target = $region21
    $region20: #{tpu_custom_call.1} parent=1 // pred_region
      _
    $region21: #{tpu_custom_call.1} parent=1 // pred_fallthru
      _
    // Predicated region
    $region22: #{tpu_custom_call.1} parent=1 // pred_check
      _
    $region23: #{tpu_custom_call.1} parent=1 // pred_check_branch
      %46 = sbr.rel (0) target = $region25
    $region24: #{tpu_custom_call.1} parent=1 // pred_region
      _
    $region25: #{tpu_custom_call.1} parent=1 // pred_fallthru
      _
    // Predicated region
    $region26: #{tpu_custom_call.1} parent=1 // pred_check
      _
    $region27: #{tpu_custom_call.1} parent=1 // pred_check_branch
      %48 = sbr.rel (0) target = $region29
    $region28: #{tpu_custom_call.1} parent=1 // pred_region
      _
    $region29: #{tpu_custom_call.1} parent=1 // pred_fallthru
      _
    // Predicated region
    $region30: #{tpu_custom_call.1} parent=1 // pred_check
      _
    $region31: #{tpu_custom_call.1} parent=1 // pred_check_branch
      %50 = sbr.rel (0) target = $region33
    $region32: #{tpu_custom_call.1} parent=1 // pred_region
      _
    $region33: #{tpu_custom_call.1} parent=1 // pred_fallthru
      _
    // Predicated region
    $region34: #{tpu_custom_call.1} parent=1 // pred_check
      _
    $region35: #{tpu_custom_call.1} parent=1 // pred_check_branch
      %52 = sbr.rel (0) target = $region37
    $region36: #{tpu_custom_call.1} parent=1 // pred_region
      %s54 = ssub.s32 256, 256
      %55 = vsyncadd [#allocation6], %s54
      %s56 = sshll.u32 [#allocation5], 4
      %s57 = int_to_ptr.vmem [resolvable:$true] %s56
      %62 = dma.hbm_to_vmem [thread:$0]  %s8, 256, %s57, [#allocation6], 128, 128, 8
    $region37: #{tpu_custom_call.1} parent=1 // pred_fallthru
      _
    // Predicated region
    $region38: #{tpu_custom_call.1} parent=1 // pred_check
      _
    $region39: #{tpu_custom_call.1} parent=1 // pred_check_branch
      %64 = sbr.rel (0) target = $region41
    $region40: #{tpu_custom_call.1} parent=1 // pred_region
      %s66 = ssub.s32 256, 256
      %67 = vsyncadd [#allocation6], %s66
      %s68 = sshll.u32 [#allocation7], 4
      %s69 = int_to_ptr.vmem [resolvable:$true] %s68
      %74 = dma.hbm_to_vmem [thread:$0]  %s9, 256, %s69, [#allocation6], 128, 128, 8
    $region41: #{tpu_custom_call.1} parent=1 // pred_fallthru
      _
    // Predicated region
    $region42: #{tpu_custom_call.1} parent=1 // pred_check
      _
    $region43: #{tpu_custom_call.1} parent=1 // pred_check_branch
      %76 = sbr.rel (0) target = $region45
    $region44: #{tpu_custom_call.1} parent=1 // pred_region
      _
    $region45: #{tpu_custom_call.1} parent=1 // pred_fallthru
      _
    // Predicated region
    $region46: #{tpu_custom_call.1} parent=1 // pred_check
      _
    $region47: #{tpu_custom_call.1} parent=1 // pred_check_branch
      %78 = sbr.rel (0) target = $region49
    $region48: #{tpu_custom_call.1} parent=1 // pred_region
      _
    $region49: #{tpu_custom_call.1} parent=1 // pred_fallthru
      _
    // Predicated region
    $region50: #{tpu_custom_call.1} parent=1 // pred_check
      _
    $region51: #{tpu_custom_call.1} parent=1 // pred_check_branch
      %80 = sbr.rel (0) target = $region53
    $region52: #{tpu_custom_call.1} parent=1 // pred_region
      %s82 = ssub.s32 256, 256
      %83 = vsyncadd [#allocation9], %s82
      %s84 = sshll.u32 [#allocation8], 4
      %s85 = int_to_ptr.vmem [resolvable:$true] %s84
      %90 = dma.hbm_to_vmem [thread:$0]  %s12, 256, %s85, [#allocation9], 128, 128, 8
    $region53: #{tpu_custom_call.1} parent=1 // pred_fallthru
      _
    // Predicated region
    $region54: #{tpu_custom_call.1} parent=1 // pred_check
      _
    $region55: #{tpu_custom_call.1} parent=1 // pred_check_branch
      %92 = sbr.rel (0) target = $region57
    $region56: #{tpu_custom_call.1} parent=1 // pred_region
      _
    $region57: #{tpu_custom_call.1} parent=1 // pred_fallthru
      _
    // Predicated region
    $region58: #{tpu_custom_call.1} parent=1 // pred_check
      _
    $region59: #{tpu_custom_call.1} parent=1 // pred_check_branch
      %94 = sbr.rel (0) target = $region61
    $region60: #{tpu_custom_call.1} parent=1 // pred_region
      _
    $region61: #{tpu_custom_call.1} parent=1 // pred_fallthru
      _
    // Predicated region
    $region62: #{tpu_custom_call.1} parent=1 // pred_check
      _
    $region63: #{tpu_custom_call.1} parent=1 // pred_check_branch
      %96 = sbr.rel (0) target = $region65
    $region64: #{tpu_custom_call.1} parent=1 // pred_region
      _
    $region65: #{tpu_custom_call.1} parent=1 // pred_fallthru
      _
    // Predicated region
    $region66: #{tpu_custom_call.1} parent=1 // pred_check
      _
    $region67: #{tpu_custom_call.1} parent=1 // pred_check_branch
      %98 = sbr.rel (0) target = $region69
    $region68: #{tpu_custom_call.1} parent=1 // pred_region
      %99 = dma.done [#allocation3], 256
    $region69: #{tpu_custom_call.1} parent=1 // pred_fallthru
      _
    // Predicated region
    $region70: #{tpu_custom_call.1} parent=1 // pred_check
      _
    $region71: #{tpu_custom_call.1} parent=1 // pred_check_branch
      %101 = sbr.rel (0) target = $region73
    $region72: #{tpu_custom_call.1} parent=1 // pred_region
      %102 = dma.done [#allocation6], 256
    $region73: #{tpu_custom_call.1} parent=1 // pred_fallthru
      _
    // Predicated region
    $region74: #{tpu_custom_call.1} parent=1 // pred_check
      _
    $region75: #{tpu_custom_call.1} parent=1 // pred_check_branch
      %104 = sbr.rel (0) target = $region77
    $region76: #{tpu_custom_call.1} parent=1 // pred_region
      %105 = dma.done [#allocation6], 256
    $region77: #{tpu_custom_call.1} parent=1 // pred_fallthru
      _
    // Predicated region
    $region78: #{tpu_custom_call.1} parent=1 // pred_check
      _
    $region79: #{tpu_custom_call.1} parent=1 // pred_check_branch
      %107 = sbr.rel (0) target = $region81
    $region80: #{tpu_custom_call.1} parent=1 // pred_region
      %108 = dma.done [#allocation9], 256
    $region81: #{tpu_custom_call.1} parent=1 // pred_fallthru
      _
    %v109 = vld [vmem:[#allocation2] sm:$0xff]
    %v110 = vld [vmem:[#allocation2 + $0x8] sm:$0xff]
    %v111 = vld [vmem:[%s1] sm:$0x1]
    %vm112 = vcmask 261120
    %v113 = vsel %vm112, %v109, 0.0
    %114 = vadd.xlane.f32.xlu0 %v113
    %v115 = vpop.xlane.xlu0 %114
    %v116 = vsel %vm112, %v110, 0.0
    %117 = vadd.xlane.f32.xlu0 %v116
    %v118 = vpop.xlane.xlu0 %117
    %v119 = vrcp.pop 32.0
    %v120 = vmul.f32 %v115, %v119
    %v121 = vmul.f32 %v118, %v119
    %v122 = vmul.f32 %v109, %v109
    %v123 = vmul.f32 %v110, %v110
    %v124 = vsel %vm112, %v122, 0.0
    %125 = vadd.xlane.f32.xlu0 %v124
    %v126 = vpop.xlane.xlu0 %125
    %v127 = vsel %vm112, %v123, 0.0
    %128 = vadd.xlane.f32.xlu0 %v127
    %v129 = vpop.xlane.xlu0 %128
    %v130 = vmul.f32 %v126, %v119
    %v131 = vmul.f32 %v129, %v119
    %v132 = vmul.f32 %v120, %v120
    %v133 = vmul.f32 %v121, %v121
    %v134 = vsub.f32 %v130, %v132
    %v135 = vsub.f32 %v131, %v133
    %v136 = vsub.f32 %v109, %v120
    %v137 = vsub.f32 %v110, %v121
    %v138 = vadd.f32 %v134, 1e-05
    %v139 = vadd.f32 %v135, 1e-05
    %v140 = vrsqrt.pop %v138
    %v141 = vrsqrt.pop %v139
    %v142 = vmul.f32 %v136, %v140
    %v143 = vmul.f32 %v137, %v141
    %v145 = vlaneseq
    %v146 = vshrl.u32 %v145, 7
    %v147 = vsub.s32 0, %v146
    %v148 = vrot.slane %v111, %v147
    %v150 = vmul.f32 %v142, %v148
    %v151 = vmul.f32 %v143, %v148
    %v152 = vld [vmem:[%s3] sm:$0xff]
    %v153 = vld [vmem:[%s3 + $0x8] sm:$0xff]
    %v154 = vld [vmem:[%s3 + $0x10] sm:$0xff]
    %v155 = vld [vmem:[%s3 + $0x18] sm:$0xff]
    %v157 = vsel %vm112, %v150, 0
    %v160 = vsel %vm112, %v151, 0
    %162 = vmatprep.subr.mxu0 0.0
    %163 = vmatpush1.msra.mxu0 %v152
    %164 = vmatprep.subr.mxu0 0.0
    %165 = vmatpush1.msra.mxu0 %v153
    %166 = vmatprep.subr.mxu0 0.0
    %167 = vmatpush1.msra.mxu0 %v154
    %168 = vmatprep.subr.mxu0 0.0
    %169 = vmatpush1.msra.mxu0 %v155
    %170 = vmatprep.subr.mxu0 0.0
    %171 = vmatpush1.msra.mxu0 0.0
    %172 = vmatprep.subr.mxu0 0.0
    %173 = vmatpush1.msra.mxu0 0.0
    %174 = vmatprep.subr.mxu0 0.0
    %175 = vmatpush1.msra.mxu0 0.0
    %176 = vmatprep.subr.mxu0 0.0
    %177 = vmatpush1.msra.mxu0 0.0
    %178 = vmatprep.subr.mxu0 0.0
    %179 = vmatpush1.msra.mxu0 0.0
    %180 = vmatprep.subr.mxu0 0.0
    %181 = vmatpush1.msra.mxu0 0.0
    %182 = vmatprep.subr.mxu0 0.0
    %183 = vmatpush1.msra.mxu0 0.0
    %184 = vmatprep.subr.mxu0 0.0
    %185 = vmatpush1.msra.mxu0 0.0
    %186 = vmatprep.subr.mxu0 0.0
    %187 = vmatpush1.msra.mxu0 0.0
    %188 = vmatprep.subr.mxu0 0.0
    %189 = vmatpush1.msra.mxu0 0.0
    %190 = vmatprep.subr.mxu0 0.0
    %191 = vmatpush1.msra.mxu0 0.0
    %192 = vmatprep.subr.mxu0 0.0
    %193 = vmatpush1.msra.mxu0 0.0
    %194 = vmatprep.subr.mxu0 0.0
    %195 = vmatpush1.msra.mxu0 0.0
    %196 = vmatprep.subr.mxu0 0.0
    %197 = vmatpush1.msra.mxu0 0.0
    %198 = vmatprep.subr.mxu0 0.0
    %199 = vmatpush1.msra.mxu0 0.0
    %200 = vmatprep.subr.mxu0 0.0
    %201 = vmatpush1.msra.mxu0 0.0
    %202 = vmatprep.subr.mxu0 0.0
    %203 = vmatpush1.msra.mxu0 0.0
    %204 = vmatprep.subr.mxu0 0.0
    %205 = vmatpush1.msra.mxu0 0.0
    %206 = vmatprep.subr.mxu0 0.0
    %207 = vmatpush1.msra.mxu0 0.0
    %208 = vmatprep.subr.mxu0 0.0
    %209 = vmatpush1.msra.mxu0 0.0
    %210 = vmatprep.subr.mxu0 0.0
    %211 = vmatpush1.msra.mxu0 0.0
    %212 = vmatprep.subr.mxu0 0.0
    %213 = vmatpush1.msra.mxu0 0.0
    %214 = vmatprep.subr.mxu0 0.0
    %215 = vmatpush1.msra.mxu0 0.0
    %216 = vmatprep.subr.mxu0 0.0
    %217 = vmatpush1.msra.mxu0 0.0
    %218 = vmatprep.subr.mxu0 0.0
    %219 = vmatpush1.msra.mxu0 0.0
    %220 = vmatprep.subr.mxu0 0.0
    %221 = vmatpush1.msra.mxu0 0.0
    %222 = vmatprep.subr.mxu0 0.0
    %223 = vmatpush1.msra.mxu0 0.0
    %224 = vmatprep.subr.mxu0 0.0
    %225 = vmatpush1.msra.mxu0 0.0
    %226 = vmatprep.mubr.f32.mxu0 0.0
    %227 = vmatmul.mubr.f32.gmra.mrb[0].mxu0 %v157
    %v228 = vpop.f32.mrb[0].mxu0
    %v229 = vadd.f32 0.0, %v228
    %v230 = vpop.f32.mrb[0].mxu0
    %231 = vmatprep.mubr.f32.mxu0 0.0
    %232 = vmatmul.mubr.f32.gmra.mrb[0].mxu0 %v160
    %v233 = vpop.f32.mrb[0].mxu0
    %v234 = vadd.f32 0.0, %v233
    %v235 = vpop.f32.mrb[0].mxu0
    %236 = vdwg.mxu0
    %v237 = vld [vmem:[%s4] sm:$0xff]
    %v238 = vld [vmem:[%s4 + $0x8] sm:$0xff]
    %v239 = vld [vmem:[%s4 + $0x10] sm:$0xff]
    %v240 = vld [vmem:[%s4 + $0x18] sm:$0xff]
    %241 = vmatprep.subr.mxu0 0.0
    %242 = vmatpush1.msra.mxu0 %v237
    %243 = vmatprep.subr.mxu0 0.0
    %244 = vmatpush1.msra.mxu0 %v238
    %245 = vmatprep.subr.mxu0 0.0
    %246 = vmatpush1.msra.mxu0 %v239
    %247 = vmatprep.subr.mxu0 0.0
    %248 = vmatpush1.msra.mxu0 %v240
    %249 = vmatprep.subr.mxu0 0.0
    %250 = vmatpush1.msra.mxu0 0.0
    %251 = vmatprep.subr.mxu0 0.0
    %252 = vmatpush1.msra.mxu0 0.0
    %253 = vmatprep.subr.mxu0 0.0
    %254 = vmatpush1.msra.mxu0 0.0
    %255 = vmatprep.subr.mxu0 0.0
    %256 = vmatpush1.msra.mxu0 0.0
    %257 = vmatprep.subr.mxu0 0.0
    %258 = vmatpush1.msra.mxu0 0.0
    %259 = vmatprep.subr.mxu0 0.0
    %260 = vmatpush1.msra.mxu0 0.0
    %261 = vmatprep.subr.mxu0 0.0
    %262 = vmatpush1.msra.mxu0 0.0
    %263 = vmatprep.subr.mxu0 0.0
    %264 = vmatpush1.msra.mxu0 0.0
    %265 = vmatprep.subr.mxu0 0.0
    %266 = vmatpush1.msra.mxu0 0.0
    %267 = vmatprep.subr.mxu0 0.0
    %268 = vmatpush1.msra.mxu0 0.0
    %269 = vmatprep.subr.mxu0 0.0
    %270 = vmatpush1.msra.mxu0 0.0
    %271 = vmatprep.subr.mxu0 0.0
    %272 = vmatpush1.msra.mxu0 0.0
    %273 = vmatprep.subr.mxu0 0.0
    %274 = vmatpush1.msra.mxu0 0.0
    %275 = vmatprep.subr.mxu0 0.0
    %276 = vmatpush1.msra.mxu0 0.0
    %277 = vmatprep.subr.mxu0 0.0
    %278 = vmatpush1.msra.mxu0 0.0
    %279 = vmatprep.subr.mxu0 0.0
    %280 = vmatpush1.msra.mxu0 0.0
    %281 = vmatprep.subr.mxu0 0.0
    %282 = vmatpush1.msra.mxu0 0.0
    %283 = vmatprep.subr.mxu0 0.0
    %284 = vmatpush1.msra.mxu0 0.0
    %285 = vmatprep.subr.mxu0 0.0
    %286 = vmatpush1.msra.mxu0 0.0
    %287 = vmatprep.subr.mxu0 0.0
    %288 = vmatpush1.msra.mxu0 0.0
    %289 = vmatprep.subr.mxu0 0.0
    %290 = vmatpush1.msra.mxu0 0.0
    %291 = vmatprep.subr.mxu0 0.0
    %292 = vmatpush1.msra.mxu0 0.0
    %293 = vmatprep.subr.mxu0 0.0
    %294 = vmatpush1.msra.mxu0 0.0
    %295 = vmatprep.subr.mxu0 0.0
    %296 = vmatpush1.msra.mxu0 0.0
    %297 = vmatprep.subr.mxu0 0.0
    %298 = vmatpush1.msra.mxu0 0.0
    %299 = vmatprep.subr.mxu0 0.0
    %300 = vmatpush1.msra.mxu0 0.0
    %301 = vmatprep.subr.mxu0 0.0
    %302 = vmatpush1.msra.mxu0 0.0
    %303 = vmatprep.subr.mxu0 0.0
    %304 = vmatpush1.msra.mxu0 0.0
    %305 = vmatprep.mubr.f32.mxu0 0.0
    %306 = vmatmul.mubr.f32.gmra.mrb[0].mxu0 %v157
    %v307 = vpop.f32.mrb[0].mxu0
    %v308 = vadd.f32 0.0, %v307
    %v309 = vpop.f32.mrb[0].mxu0
    %310 = vmatprep.mubr.f32.mxu0 0.0
    %311 = vmatmul.mubr.f32.gmra.mrb[0].mxu0 %v160
    %v312 = vpop.f32.mrb[0].mxu0
    %v313 = vadd.f32 0.0, %v312
    %v314 = vpop.f32.mrb[0].mxu0
    %315 = vdwg.mxu0
    %v316 = vld [vmem:[%s5] sm:$0xff]
    %v317 = vld [vmem:[%s5 + $0x8] sm:$0xff]
    %v318 = vld [vmem:[%s5 + $0x10] sm:$0xff]
    %v319 = vld [vmem:[%s5 + $0x18] sm:$0xff]
    %320 = vmatprep.subr.mxu0 0.0
    %321 = vmatpush1.msra.mxu0 %v316
    %322 = vmatprep.subr.mxu0 0.0
    %323 = vmatpush1.msra.mxu0 %v317
    %324 = vmatprep.subr.mxu0 0.0
    %325 = vmatpush1.msra.mxu0 %v318
    %326 = vmatprep.subr.mxu0 0.0
    %327 = vmatpush1.msra.mxu0 %v319
    %328 = vmatprep.subr.mxu0 0.0
    %329 = vmatpush1.msra.mxu0 0.0
    %330 = vmatprep.subr.mxu0 0.0
    %331 = vmatpush1.msra.mxu0 0.0
    %332 = vmatprep.subr.mxu0 0.0
    %333 = vmatpush1.msra.mxu0 0.0
    %334 = vmatprep.subr.mxu0 0.0
    %335 = vmatpush1.msra.mxu0 0.0
    %336 = vmatprep.subr.mxu0 0.0
    %337 = vmatpush1.msra.mxu0 0.0
    %338 = vmatprep.subr.mxu0 0.0
    %339 = vmatpush1.msra.mxu0 0.0
    %340 = vmatprep.subr.mxu0 0.0
    %341 = vmatpush1.msra.mxu0 0.0
    %342 = vmatprep.subr.mxu0 0.0
    %343 = vmatpush1.msra.mxu0 0.0
    %344 = vmatprep.subr.mxu0 0.0
    %345 = vmatpush1.msra.mxu0 0.0
    %346 = vmatprep.subr.mxu0 0.0
    %347 = vmatpush1.msra.mxu0 0.0
    %348 = vmatprep.subr.mxu0 0.0
    %349 = vmatpush1.msra.mxu0 0.0
    %350 = vmatprep.subr.mxu0 0.0
    %351 = vmatpush1.msra.mxu0 0.0
    %352 = vmatprep.subr.mxu0 0.0
    %353 = vmatpush1.msra.mxu0 0.0
    %354 = vmatprep.subr.mxu0 0.0
    %355 = vmatpush1.msra.mxu0 0.0
    %356 = vmatprep.subr.mxu0 0.0
    %357 = vmatpush1.msra.mxu0 0.0
    %358 = vmatprep.subr.mxu0 0.0
    %359 = vmatpush1.msra.mxu0 0.0
    %360 = vmatprep.subr.mxu0 0.0
    %361 = vmatpush1.msra.mxu0 0.0
    %362 = vmatprep.subr.mxu0 0.0
    %363 = vmatpush1.msra.mxu0 0.0
    %364 = vmatprep.subr.mxu0 0.0
    %365 = vmatpush1.msra.mxu0 0.0
    %366 = vmatprep.subr.mxu0 0.0
    %367 = vmatpush1.msra.mxu0 0.0
    %368 = vmatprep.subr.mxu0 0.0
    %369 = vmatpush1.msra.mxu0 0.0
    %370 = vmatprep.subr.mxu0 0.0
    %371 = vmatpush1.msra.mxu0 0.0
    %372 = vmatprep.subr.mxu0 0.0
    %373 = vmatpush1.msra.mxu0 0.0
    %374 = vmatprep.subr.mxu0 0.0
    %375 = vmatpush1.msra.mxu0 0.0
    %376 = vmatprep.subr.mxu0 0.0
    %377 = vmatpush1.msra.mxu0 0.0
    %378 = vmatprep.subr.mxu0 0.0
    %379 = vmatpush1.msra.mxu0 0.0
    %380 = vmatprep.subr.mxu0 0.0
    %381 = vmatpush1.msra.mxu0 0.0
    %382 = vmatprep.subr.mxu0 0.0
    %383 = vmatpush1.msra.mxu0 0.0
    %384 = vmatprep.mubr.f32.mxu0 0.0
    %385 = vmatmul.mubr.f32.gmra.mrb[0].mxu0 %v157
    %v386 = vpop.f32.mrb[0].mxu0
    %v387 = vadd.f32 0.0, %v386
    %v388 = vpop.f32.mrb[0].mxu0
    %389 = vmatprep.mubr.f32.mxu0 0.0
    %390 = vmatmul.mubr.f32.gmra.mrb[0].mxu0 %v160
    %v391 = vpop.f32.mrb[0].mxu0
    %v392 = vadd.f32 0.0, %v391
    %v393 = vpop.f32.mrb[0].mxu0
    %394 = vdwg.mxu0
    %v395 = vmax.f32 %v387, -100.0
    %v396 = vmax.f32 %v392, -100.0
    %v397 = vmin.f32 %v395, 100.0
    %v398 = vmin.f32 %v396, 100.0
    %v399 = vld [vmem:[%s7] sm:$0xff]
    %v400 = vld [vmem:[%s7 + $0x8] sm:$0xff]
    %v401 = vld [vmem:[%s7 + $0x10] sm:$0xff]
    %v402 = vld [vmem:[%s7 + $0x18] sm:$0xff]
    %v403 = vld [vmem:[#allocation5] sm:$0xff]
    %v404 = vld [vmem:[#allocation5 + $0x8] sm:$0xff]
    %v405 = vld [vmem:[#allocation7] sm:$0xff]
    %v406 = vld [vmem:[#allocation7 + $0x8] sm:$0xff]
    %v407 = vmul.f32 %v229, %v403
    %v408 = vmul.f32 %v234, %v404
    %v410 = vsel %vm112, %v229, 0
    %v413 = vsel %vm112, %v234, 0
    %415 = vmatprep.subr.mxu0 0.0
    %416 = vmatpush1.msra.mxu0 %v399
    %417 = vmatprep.subr.mxu0 0.0
    %418 = vmatpush1.msra.mxu0 %v400
    %419 = vmatprep.subr.mxu0 0.0
    %420 = vmatpush1.msra.mxu0 %v401
    %421 = vmatprep.subr.mxu0 0.0
    %422 = vmatpush1.msra.mxu0 %v402
    %423 = vmatprep.subr.mxu0 0.0
    %424 = vmatpush1.msra.mxu0 0.0
    %425 = vmatprep.subr.mxu0 0.0
    %426 = vmatpush1.msra.mxu0 0.0
    %427 = vmatprep.subr.mxu0 0.0
    %428 = vmatpush1.msra.mxu0 0.0
    %429 = vmatprep.subr.mxu0 0.0
    %430 = vmatpush1.msra.mxu0 0.0
    %431 = vmatprep.subr.mxu0 0.0
    %432 = vmatpush1.msra.mxu0 0.0
    %433 = vmatprep.subr.mxu0 0.0
    %434 = vmatpush1.msra.mxu0 0.0
    %435 = vmatprep.subr.mxu0 0.0
    %436 = vmatpush1.msra.mxu0 0.0
    %437 = vmatprep.subr.mxu0 0.0
    %438 = vmatpush1.msra.mxu0 0.0
    %439 = vmatprep.subr.mxu0 0.0
    %440 = vmatpush1.msra.mxu0 0.0
    %441 = vmatprep.subr.mxu0 0.0
    %442 = vmatpush1.msra.mxu0 0.0
    %443 = vmatprep.subr.mxu0 0.0
    %444 = vmatpush1.msra.mxu0 0.0
    %445 = vmatprep.subr.mxu0 0.0
    %446 = vmatpush1.msra.mxu0 0.0
    %447 = vmatprep.subr.mxu0 0.0
    %448 = vmatpush1.msra.mxu0 0.0
    %449 = vmatprep.subr.mxu0 0.0
    %450 = vmatpush1.msra.mxu0 0.0
    %451 = vmatprep.subr.mxu0 0.0
    %452 = vmatpush1.msra.mxu0 0.0
    %453 = vmatprep.subr.mxu0 0.0
    %454 = vmatpush1.msra.mxu0 0.0
    %455 = vmatprep.subr.mxu0 0.0
    %456 = vmatpush1.msra.mxu0 0.0
    %457 = vmatprep.subr.mxu0 0.0
    %458 = vmatpush1.msra.mxu0 0.0
    %459 = vmatprep.subr.mxu0 0.0
    %460 = vmatpush1.msra.mxu0 0.0
    %461 = vmatprep.subr.mxu0 0.0
    %462 = vmatpush1.msra.mxu0 0.0
    %463 = vmatprep.subr.mxu0 0.0
    %464 = vmatpush1.msra.mxu0 0.0
    %465 = vmatprep.subr.mxu0 0.0
    %466 = vmatpush1.msra.mxu0 0.0
    %467 = vmatprep.subr.mxu0 0.0
    %468 = vmatpush1.msra.mxu0 0.0
    %469 = vmatprep.subr.mxu0 0.0
    %470 = vmatpush1.msra.mxu0 0.0
    %471 = vmatprep.subr.mxu0 0.0
    %472 = vmatpush1.msra.mxu0 0.0
    %473 = vmatprep.subr.mxu0 0.0
    %474 = vmatpush1.msra.mxu0 0.0
    %475 = vmatprep.subr.mxu0 0.0
    %476 = vmatpush1.msra.mxu0 0.0
    %477 = vmatprep.subr.mxu0 0.0
    %478 = vmatpush1.msra.mxu0 0.0
    %479 = vmatprep.mubr.f32.mxu0 0.0
    %480 = vmatmul.mubr.f32.gmra.mrb[0].mxu0 %v410
    %v481 = vpop.f32.mrb[0].mxu0
    %v482 = vadd.f32 0.0, %v481
    %v483 = vpop.f32.mrb[0].mxu0
    %484 = vmatprep.mubr.f32.mxu0 0.0
    %485 = vmatmul.mubr.f32.gmra.mrb[0].mxu0 %v413
    %v486 = vpop.f32.mrb[0].mxu0
    %v487 = vadd.f32 0.0, %v486
    %v488 = vpop.f32.mrb[0].mxu0
    %489 = vdwg.mxu0
    %v490 = vmul.f32 %v482, %v405
    %v491 = vmul.f32 %v487, %v406
    %v492 = vadd.f32 %v407, %v490
    %v493 = vadd.f32 %v408, %v491
    %v494 = vmax.f32 %v492, -100.0
    %v495 = vmax.f32 %v493, -100.0
    %v496 = vmin.f32 %v494, 100.0
    %v497 = vmin.f32 %v495, 100.0
    %v498 = vmul.f32 %v308, %v403
    %v499 = vmul.f32 %v313, %v404
    %v501 = vsel %vm112, %v308, 0
    %v504 = vsel %vm112, %v313, 0
    %506 = vmatprep.subr.mxu0 0.0
    %507 = vmatpush1.msra.mxu0 %v399
    %508 = vmatprep.subr.mxu0 0.0
    %509 = vmatpush1.msra.mxu0 %v400
    %510 = vmatprep.subr.mxu0 0.0
    %511 = vmatpush1.msra.mxu0 %v401
    %512 = vmatprep.subr.mxu0 0.0
    %513 = vmatpush1.msra.mxu0 %v402
    %514 = vmatprep.subr.mxu0 0.0
    %515 = vmatpush1.msra.mxu0 0.0
    %516 = vmatprep.subr.mxu0 0.0
    %517 = vmatpush1.msra.mxu0 0.0
    %518 = vmatprep.subr.mxu0 0.0
    %519 = vmatpush1.msra.mxu0 0.0
    %520 = vmatprep.subr.mxu0 0.0
    %521 = vmatpush1.msra.mxu0 0.0
    %522 = vmatprep.subr.mxu0 0.0
    %523 = vmatpush1.msra.mxu0 0.0
    %524 = vmatprep.subr.mxu0 0.0
    %525 = vmatpush1.msra.mxu0 0.0
    %526 = vmatprep.subr.mxu0 0.0
    %527 = vmatpush1.msra.mxu0 0.0
    %528 = vmatprep.subr.mxu0 0.0
    %529 = vmatpush1.msra.mxu0 0.0
    %530 = vmatprep.subr.mxu0 0.0
    %531 = vmatpush1.msra.mxu0 0.0
    %532 = vmatprep.subr.mxu0 0.0
    %533 = vmatpush1.msra.mxu0 0.0
    %534 = vmatprep.subr.mxu0 0.0
    %535 = vmatpush1.msra.mxu0 0.0
    %536 = vmatprep.subr.mxu0 0.0
    %537 = vmatpush1.msra.mxu0 0.0
    %538 = vmatprep.subr.mxu0 0.0
    %539 = vmatpush1.msra.mxu0 0.0
    %540 = vmatprep.subr.mxu0 0.0
    %541 = vmatpush1.msra.mxu0 0.0
    %542 = vmatprep.subr.mxu0 0.0
    %543 = vmatpush1.msra.mxu0 0.0
    %544 = vmatprep.subr.mxu0 0.0
    %545 = vmatpush1.msra.mxu0 0.0
    %546 = vmatprep.subr.mxu0 0.0
    %547 = vmatpush1.msra.mxu0 0.0
    %548 = vmatprep.subr.mxu0 0.0
    %549 = vmatpush1.msra.mxu0 0.0
    %550 = vmatprep.subr.mxu0 0.0
    %551 = vmatpush1.msra.mxu0 0.0
    %552 = vmatprep.subr.mxu0 0.0
    %553 = vmatpush1.msra.mxu0 0.0
    %554 = vmatprep.subr.mxu0 0.0
    %555 = vmatpush1.msra.mxu0 0.0
    %556 = vmatprep.subr.mxu0 0.0
    %557 = vmatpush1.msra.mxu0 0.0
    %558 = vmatprep.subr.mxu0 0.0
    %559 = vmatpush1.msra.mxu0 0.0
    %560 = vmatprep.subr.mxu0 0.0
    %561 = vmatpush1.msra.mxu0 0.0
    %562 = vmatprep.subr.mxu0 0.0
    %563 = vmatpush1.msra.mxu0 0.0
    %564 = vmatprep.subr.mxu0 0.0
    %565 = vmatpush1.msra.mxu0 0.0
    %566 = vmatprep.subr.mxu0 0.0
    %567 = vmatpush1.msra.mxu0 0.0
    %568 = vmatprep.subr.mxu0 0.0
    %569 = vmatpush1.msra.mxu0 0.0
    %570 = vmatprep.mubr.f32.mxu0 0.0
    %571 = vmatmul.mubr.f32.gmra.mrb[0].mxu0 %v501
    %v572 = vpop.f32.mrb[0].mxu0
    %v573 = vadd.f32 0.0, %v572
    %v574 = vpop.f32.mrb[0].mxu0
    %575 = vmatprep.mubr.f32.mxu0 0.0
    %576 = vmatmul.mubr.f32.gmra.mrb[0].mxu0 %v504
    %v577 = vpop.f32.mrb[0].mxu0
    %v578 = vadd.f32 0.0, %v577
    %v579 = vpop.f32.mrb[0].mxu0
    %580 = vdwg.mxu0
    %v581 = vmul.f32 %v573, %v405
    %v582 = vmul.f32 %v578, %v406
    %v583 = vadd.f32 %v498, %v581
    %v584 = vadd.f32 %v499, %v582
    %v585 = vmax.f32 %v583, -100.0
    %v586 = vmax.f32 %v584, -100.0
    %v587 = vmin.f32 %v585, 100.0
    %v588 = vmin.f32 %v586, 100.0
    %v589 = vmul.f32 %v496, 0.35355338
    %v590 = vmul.f32 %v497, 0.35355338
    %v591 = vld [vmem:[%s10] sm:$0xff]
    %v592 = vld [vmem:[%s10 + $0x8] sm:$0xff]
    %v593 = vld [vmem:[%s10 + $0x10] sm:$0xff]
    %v594 = vld [vmem:[%s10 + $0x18] sm:$0xff]
    %v595 = vld [vmem:[%s10 + $0x20] sm:$0xff]
    %v596 = vld [vmem:[%s10 + $0x28] sm:$0xff]
    %v597 = vld [vmem:[%s10 + $0x30] sm:$0xff]
    %v598 = vld [vmem:[%s10 + $0x38] sm:$0xff]
    %v599 = vmul.f32 %v587, %v591
    %v600 = vmul.f32 %v588, %v592
    %v601 = vmul.f32 %v587, %v593
    %v602 = vmul.f32 %v588, %v594
    %v603 = vmul.f32 %v587, %v595
    %v604 = vmul.f32 %v588, %v596
    %v605 = vmul.f32 %v587, %v597
    %v606 = vmul.f32 %v588, %v598
    %v607 = vld [vmem:[%s11] sm:$0xff]
    %v608 = vld [vmem:[%s11 + $0x8] sm:$0xff]
    %v609 = vld [vmem:[%s11 + $0x10] sm:$0xff]
    %v610 = vld [vmem:[%s11 + $0x18] sm:$0xff]
    %v611 = vld [vmem:[%s11 + $0x20] sm:$0xff]
    %v612 = vld [vmem:[%s11 + $0x28] sm:$0xff]
    %v613 = vld [vmem:[%s11 + $0x30] sm:$0xff]
    %v614 = vld [vmem:[%s11 + $0x38] sm:$0xff]
    %v615 = vmul.f32 %v397, %v607
    %v616 = vmul.f32 %v398, %v608
    %v617 = vmul.f32 %v397, %v609
    %v618 = vmul.f32 %v398, %v610
    %v619 = vmul.f32 %v397, %v611
    %v620 = vmul.f32 %v398, %v612
    %v621 = vmul.f32 %v397, %v613
    %v622 = vmul.f32 %v398, %v614
    %v623 = vld [vmem:[#allocation8] sm:$0xff]
    %v624 = vld [vmem:[#allocation8 + $0x8] sm:$0xff]
    %v626 = vsel %vm112, %v589, 0
    %v629 = vsel %vm112, %v590, 0
    %v632 = vsel %vm112, %v599, 0
    %v635 = vsel %vm112, %v600, 0
    %v638 = vsel %vm112, %v601, 0
    %v641 = vsel %vm112, %v602, 0
    %v644 = vsel %vm112, %v603, 0
    %v647 = vsel %vm112, %v604, 0
    %v650 = vsel %vm112, %v605, 0
    %v653 = vsel %vm112, %v606, 0
    %655 = vmatprep.subr.mxu0 0.0
    %656 = vmatpush1.xpose.msra.mxu0 %v632
    %657 = vmatprep.subr.mxu0 0.0
    %658 = vmatpush1.xpose.msra.mxu0 %v635
    %659 = vmatprep.subr.mxu0 0.0
    %660 = vmatpush1.xpose.msra.mxu0 %v638
    %661 = vmatprep.subr.mxu0 0.0
    %662 = vmatpush1.xpose.msra.mxu0 %v641
    %663 = vmatprep.subr.mxu0 0.0
    %664 = vmatpush1.xpose.msra.mxu0 %v644
    %665 = vmatprep.subr.mxu0 0.0
    %666 = vmatpush1.xpose.msra.mxu0 %v647
    %667 = vmatprep.subr.mxu0 0.0
    %668 = vmatpush1.xpose.msra.mxu0 %v650
    %669 = vmatprep.subr.mxu0 0.0
    %670 = vmatpush1.xpose.msra.mxu0 %v653
    %671 = vmatprep.subr.mxu0 0.0
    %672 = vmatpush1.xpose.msra.mxu0 0.0
    %673 = vmatprep.subr.mxu0 0.0
    %674 = vmatpush1.xpose.msra.mxu0 0.0
    %675 = vmatprep.subr.mxu0 0.0
    %676 = vmatpush1.xpose.msra.mxu0 0.0
    %677 = vmatprep.subr.mxu0 0.0
    %678 = vmatpush1.xpose.msra.mxu0 0.0
    %679 = vmatprep.subr.mxu0 0.0
    %680 = vmatpush1.xpose.msra.mxu0 0.0
    %681 = vmatprep.subr.mxu0 0.0
    %682 = vmatpush1.xpose.msra.mxu0 0.0
    %683 = vmatprep.subr.mxu0 0.0
    %684 = vmatpush1.xpose.msra.mxu0 0.0
    %685 = vmatprep.subr.mxu0 0.0
    %686 = vmatpush1.xpose.msra.mxu0 0.0
    %687 = vmatprep.subr.mxu0 0.0
    %688 = vmatpush1.xpose.msra.mxu0 0.0
    %689 = vmatprep.subr.mxu0 0.0
    %690 = vmatpush1.xpose.msra.mxu0 0.0
    %691 = vmatprep.subr.mxu0 0.0
    %692 = vmatpush1.xpose.msra.mxu0 0.0
    %693 = vmatprep.subr.mxu0 0.0
    %694 = vmatpush1.xpose.msra.mxu0 0.0
    %695 = vmatprep.subr.mxu0 0.0
    %696 = vmatpush1.xpose.msra.mxu0 0.0
    %697 = vmatprep.subr.mxu0 0.0
    %698 = vmatpush1.xpose.msra.mxu0 0.0
    %699 = vmatprep.subr.mxu0 0.0
    %700 = vmatpush1.xpose.msra.mxu0 0.0
    %701 = vmatprep.subr.mxu0 0.0
    %702 = vmatpush1.xpose.msra.mxu0 0.0
    %703 = vmatprep.subr.mxu0 0.0
    %704 = vmatpush1.xpose.msra.mxu0 0.0
    %705 = vmatprep.subr.mxu0 0.0
    %706 = vmatpush1.xpose.msra.mxu0 0.0
    %707 = vmatprep.subr.mxu0 0.0
    %708 = vmatpush1.xpose.msra.mxu0 0.0
    %709 = vmatprep.subr.mxu0 0.0
    %710 = vmatpush1.xpose.msra.mxu0 0.0
    %711 = vmatprep.subr.mxu0 0.0
    %712 = vmatpush1.xpose.msra.mxu0 0.0
    %713 = vmatprep.subr.mxu0 0.0
    %714 = vmatpush1.xpose.msra.mxu0 0.0
    %715 = vmatprep.subr.mxu0 0.0
    %716 = vmatpush1.xpose.msra.mxu0 0.0
    %717 = vmatprep.subr.mxu0 0.0
    %718 = vmatpush1.xpose.msra.mxu0 0.0
    %719 = vmatprep.mubr.f32.mxu0 0.0
    %720 = vmatmul.mubr.f32.gmra.mrb[0].mxu0 %v626
    %v721 = vpop.f32.mrb[0].mxu0
    %v722 = vadd.f32 %v623, %v721
    %v723 = vpop.f32.mrb[0].mxu0
    %724 = vmatprep.mubr.f32.mxu0 0.0
    %725 = vmatmul.mubr.f32.gmra.mrb[0].mxu0 %v629
    %v726 = vpop.f32.mrb[0].mxu0
    %v727 = vadd.f32 %v624, %v726
    %v728 = vpop.f32.mrb[0].mxu0
    %729 = vdwg.mxu0
    %vm730 = vcmask 523264
    %v731 = vsel %vm730, %v722, -inf
    %732 = vmax.xlane.f32.xlu0 %v731
    %v733 = vpop.xlane.xlu0 %732
    %v734 = vsel %vm730, %v727, -inf
    %735 = vmax.xlane.f32.xlu0 %v734
    %v736 = vpop.xlane.xlu0 %735
    %v737 = vsub.f32 %v722, %v733
    %v738 = vsub.f32 %v727, %v736
    %v739 = vmul.f32 %v737, 1.442695
    %v740 = vpow.pop %v739
    %v741 = vmul.f32 %v738, 1.442695
    %v742 = vpow.pop %v741
    %v743 = vld [vmem:[%s13] sm:$0xff]
    %v744 = vld [vmem:[%s13 + $0x8] sm:$0xff]
    %v745 = vld [vmem:[%s13 + $0x10] sm:$0xff]
    %v746 = vld [vmem:[%s13 + $0x18] sm:$0xff]
    %v747 = vld [vmem:[%s13 + $0x20] sm:$0xff]
    %v748 = vld [vmem:[%s13 + $0x28] sm:$0xff]
    %v749 = vld [vmem:[%s13 + $0x30] sm:$0xff]
    %v750 = vld [vmem:[%s13 + $0x38] sm:$0xff]
    %v752 = vsel %vm730, %v740, 0
    %v755 = vsel %vm730, %v742, 0
    %757 = vmatprep.subr.mxu0 0.0
    %758 = vmatpush1.msra.mxu0 %v743
    %759 = vmatprep.subr.mxu0 0.0
    %760 = vmatpush1.msra.mxu0 %v744
    %761 = vmatprep.subr.mxu0 0.0
    %762 = vmatpush1.msra.mxu0 %v745
    %763 = vmatprep.subr.mxu0 0.0
    %764 = vmatpush1.msra.mxu0 %v746
    %765 = vmatprep.subr.mxu0 0.0
    %766 = vmatpush1.msra.mxu0 %v747
    %767 = vmatprep.subr.mxu0 0.0
    %768 = vmatpush1.msra.mxu0 %v748
    %769 = vmatprep.subr.mxu0 0.0
    %770 = vmatpush1.msra.mxu0 %v749
    %771 = vmatprep.subr.mxu0 0.0
    %772 = vmatpush1.msra.mxu0 %v750
    %773 = vmatprep.subr.mxu0 0.0
    %774 = vmatpush1.msra.mxu0 0.0
    %775 = vmatprep.subr.mxu0 0.0
    %776 = vmatpush1.msra.mxu0 0.0
    %777 = vmatprep.subr.mxu0 0.0
    %778 = vmatpush1.msra.mxu0 0.0
    %779 = vmatprep.subr.mxu0 0.0
    %780 = vmatpush1.msra.mxu0 0.0
    %781 = vmatprep.subr.mxu0 0.0
    %782 = vmatpush1.msra.mxu0 0.0
    %783 = vmatprep.subr.mxu0 0.0
    %784 = vmatpush1.msra.mxu0 0.0
    %785 = vmatprep.subr.mxu0 0.0
    %786 = vmatpush1.msra.mxu0 0.0
    %787 = vmatprep.subr.mxu0 0.0
    %788 = vmatpush1.msra.mxu0 0.0
    %789 = vmatprep.subr.mxu0 0.0
    %790 = vmatpush1.msra.mxu0 0.0
    %791 = vmatprep.subr.mxu0 0.0
    %792 = vmatpush1.msra.mxu0 0.0
    %793 = vmatprep.subr.mxu0 0.0
    %794 = vmatpush1.msra.mxu0 0.0
    %795 = vmatprep.subr.mxu0 0.0
    %796 = vmatpush1.msra.mxu0 0.0
    %797 = vmatprep.subr.mxu0 0.0
    %798 = vmatpush1.msra.mxu0 0.0
    %799 = vmatprep.subr.mxu0 0.0
    %800 = vmatpush1.msra.mxu0 0.0
    %801 = vmatprep.subr.mxu0 0.0
    %802 = vmatpush1.msra.mxu0 0.0
    %803 = vmatprep.subr.mxu0 0.0
    %804 = vmatpush1.msra.mxu0 0.0
    %805 = vmatprep.subr.mxu0 0.0
    %806 = vmatpush1.msra.mxu0 0.0
    %807 = vmatprep.subr.mxu0 0.0
    %808 = vmatpush1.msra.mxu0 0.0
    %809 = vmatprep.subr.mxu0 0.0
    %810 = vmatpush1.msra.mxu0 0.0
    %811 = vmatprep.subr.mxu0 0.0
    %812 = vmatpush1.msra.mxu0 0.0
    %813 = vmatprep.subr.mxu0 0.0
    %814 = vmatpush1.msra.mxu0 0.0
    %815 = vmatprep.subr.mxu0 0.0
    %816 = vmatpush1.msra.mxu0 0.0
    %817 = vmatprep.subr.mxu0 0.0
    %818 = vmatpush1.msra.mxu0 0.0
    %819 = vmatprep.subr.mxu0 0.0
    %820 = vmatpush1.msra.mxu0 0.0
    %821 = vmatprep.mubr.f32.mxu0 0.0
    %822 = vmatmul.mubr.f32.gmra.mrb[0].mxu0 %v752
    %v823 = vpop.f32.mrb[0].mxu0
    %v824 = vadd.f32 0.0, %v823
    %v825 = vpop.f32.mrb[0].mxu0
    %826 = vmatprep.mubr.f32.mxu0 0.0
    %827 = vmatmul.mubr.f32.gmra.mrb[0].mxu0 %v755
    %v828 = vpop.f32.mrb[0].mxu0
    %v829 = vadd.f32 0.0, %v828
    %v830 = vpop.f32.mrb[0].mxu0
    %831 = vdwg.mxu0
    %v832 = vrcp.pop %v824
    %v833 = vrcp.pop %v829
    %v834 = vmul.f32 %v740, %v832
    %v835 = vmul.f32 %v742, %v833
    %v837 = vsel %vm730, %v834, 0
    %v840 = vsel %vm730, %v835, 0
    %842 = vmatprep.subr.mxu0 0.0
    %843 = vmatpush1.msra.mxu0 %v615
    %844 = vmatprep.subr.mxu0 0.0
    %845 = vmatpush1.msra.mxu0 %v616
    %846 = vmatprep.subr.mxu0 0.0
    %847 = vmatpush1.msra.mxu0 %v617
    %848 = vmatprep.subr.mxu0 0.0
    %849 = vmatpush1.msra.mxu0 %v618
    %850 = vmatprep.subr.mxu0 0.0
    %851 = vmatpush1.msra.mxu0 %v619
    %852 = vmatprep.subr.mxu0 0.0
    %853 = vmatpush1.msra.mxu0 %v620
    %854 = vmatprep.subr.mxu0 0.0
    %855 = vmatpush1.msra.mxu0 %v621
    %856 = vmatprep.subr.mxu0 0.0
    %857 = vmatpush1.msra.mxu0 %v622
    %858 = vmatprep.subr.mxu0 0.0
    %859 = vmatpush1.msra.mxu0 0.0
    %860 = vmatprep.subr.mxu0 0.0
    %861 = vmatpush1.msra.mxu0 0.0
    %862 = vmatprep.subr.mxu0 0.0
    %863 = vmatpush1.msra.mxu0 0.0
    %864 = vmatprep.subr.mxu0 0.0
    %865 = vmatpush1.msra.mxu0 0.0
    %866 = vmatprep.subr.mxu0 0.0
    %867 = vmatpush1.msra.mxu0 0.0
    %868 = vmatprep.subr.mxu0 0.0
    %869 = vmatpush1.msra.mxu0 0.0
    %870 = vmatprep.subr.mxu0 0.0
    %871 = vmatpush1.msra.mxu0 0.0
    %872 = vmatprep.subr.mxu0 0.0
    %873 = vmatpush1.msra.mxu0 0.0
    %874 = vmatprep.subr.mxu0 0.0
    %875 = vmatpush1.msra.mxu0 0.0
    %876 = vmatprep.subr.mxu0 0.0
    %877 = vmatpush1.msra.mxu0 0.0
    %878 = vmatprep.subr.mxu0 0.0
    %879 = vmatpush1.msra.mxu0 0.0
    %880 = vmatprep.subr.mxu0 0.0
    %881 = vmatpush1.msra.mxu0 0.0
    %882 = vmatprep.subr.mxu0 0.0
    %883 = vmatpush1.msra.mxu0 0.0
    %884 = vmatprep.subr.mxu0 0.0
    %885 = vmatpush1.msra.mxu0 0.0
    %886 = vmatprep.subr.mxu0 0.0
    %887 = vmatpush1.msra.mxu0 0.0
    %888 = vmatprep.subr.mxu0 0.0
    %889 = vmatpush1.msra.mxu0 0.0
    %890 = vmatprep.subr.mxu0 0.0
    %891 = vmatpush1.msra.mxu0 0.0
    %892 = vmatprep.subr.mxu0 0.0
    %893 = vmatpush1.msra.mxu0 0.0
    %894 = vmatprep.subr.mxu0 0.0
    %895 = vmatpush1.msra.mxu0 0.0
    %896 = vmatprep.subr.mxu0 0.0
    %897 = vmatpush1.msra.mxu0 0.0
    %898 = vmatprep.subr.mxu0 0.0
    %899 = vmatpush1.msra.mxu0 0.0
    %900 = vmatprep.subr.mxu0 0.0
    %901 = vmatpush1.msra.mxu0 0.0
    %902 = vmatprep.subr.mxu0 0.0
    %903 = vmatpush1.msra.mxu0 0.0
    %904 = vmatprep.subr.mxu0 0.0
    %905 = vmatpush1.msra.mxu0 0.0
    %906 = vmatprep.mubr.f32.mxu0 0.0
    %907 = vmatmul.mubr.f32.gmra.mrb[0].mxu0 %v837
    %v908 = vpop.f32.mrb[0].mxu0
    %v909 = vadd.f32 0.0, %v908
    %v910 = vpop.f32.mrb[0].mxu0
    %911 = vmatprep.mubr.f32.mxu0 0.0
    %912 = vmatmul.mubr.f32.gmra.mrb[0].mxu0 %v840
    %v913 = vpop.f32.mrb[0].mxu0
    %v914 = vadd.f32 0.0, %v913
    %v915 = vpop.f32.mrb[0].mxu0
    %916 = vdwg.mxu0
    %v917 = vld [vmem:[%s6] sm:$0xff]
    %v918 = vld [vmem:[%s6 + $0x8] sm:$0xff]
    %v919 = vld [vmem:[%s6 + $0x10] sm:$0xff]
    %v920 = vld [vmem:[%s6 + $0x18] sm:$0xff]
    %v922 = vsel %vm112, %v909, 0
    %v925 = vsel %vm112, %v914, 0
    %927 = vmatprep.subr.mxu0 0.0
    %928 = vmatpush1.msra.mxu0 %v917
    %929 = vmatprep.subr.mxu0 0.0
    %930 = vmatpush1.msra.mxu0 %v918
    %931 = vmatprep.subr.mxu0 0.0
    %932 = vmatpush1.msra.mxu0 %v919
    %933 = vmatprep.subr.mxu0 0.0
    %934 = vmatpush1.msra.mxu0 %v920
    %935 = vmatprep.subr.mxu0 0.0
    %936 = vmatpush1.msra.mxu0 0.0
    %937 = vmatprep.subr.mxu0 0.0
    %938 = vmatpush1.msra.mxu0 0.0
    %939 = vmatprep.subr.mxu0 0.0
    %940 = vmatpush1.msra.mxu0 0.0
    %941 = vmatprep.subr.mxu0 0.0
    %942 = vmatpush1.msra.mxu0 0.0
    %943 = vmatprep.subr.mxu0 0.0
    %944 = vmatpush1.msra.mxu0 0.0
    %945 = vmatprep.subr.mxu0 0.0
    %946 = vmatpush1.msra.mxu0 0.0
    %947 = vmatprep.subr.mxu0 0.0
    %948 = vmatpush1.msra.mxu0 0.0
    %949 = vmatprep.subr.mxu0 0.0
    %950 = vmatpush1.msra.mxu0 0.0
    %951 = vmatprep.subr.mxu0 0.0
    %952 = vmatpush1.msra.mxu0 0.0
    %953 = vmatprep.subr.mxu0 0.0
    %954 = vmatpush1.msra.mxu0 0.0
    %955 = vmatprep.subr.mxu0 0.0
    %956 = vmatpush1.msra.mxu0 0.0
    %957 = vmatprep.subr.mxu0 0.0
    %958 = vmatpush1.msra.mxu0 0.0
    %959 = vmatprep.subr.mxu0 0.0
    %960 = vmatpush1.msra.mxu0 0.0
    %961 = vmatprep.subr.mxu0 0.0
    %962 = vmatpush1.msra.mxu0 0.0
    %963 = vmatprep.subr.mxu0 0.0
    %964 = vmatpush1.msra.mxu0 0.0
    %965 = vmatprep.subr.mxu0 0.0
    %966 = vmatpush1.msra.mxu0 0.0
    %967 = vmatprep.subr.mxu0 0.0
    %968 = vmatpush1.msra.mxu0 0.0
    %969 = vmatprep.subr.mxu0 0.0
    %970 = vmatpush1.msra.mxu0 0.0
    %971 = vmatprep.subr.mxu0 0.0
    %972 = vmatpush1.msra.mxu0 0.0
    %973 = vmatprep.subr.mxu0 0.0
    %974 = vmatpush1.msra.mxu0 0.0
    %975 = vmatprep.subr.mxu0 0.0
    %976 = vmatpush1.msra.mxu0 0.0
    %977 = vmatprep.subr.mxu0 0.0
    %978 = vmatpush1.msra.mxu0 0.0
    %979 = vmatprep.subr.mxu0 0.0
    %980 = vmatpush1.msra.mxu0 0.0
    %981 = vmatprep.subr.mxu0 0.0
    %982 = vmatpush1.msra.mxu0 0.0
    %983 = vmatprep.subr.mxu0 0.0
    %984 = vmatpush1.msra.mxu0 0.0
    %985 = vmatprep.subr.mxu0 0.0
    %986 = vmatpush1.msra.mxu0 0.0
    %987 = vmatprep.subr.mxu0 0.0
    %988 = vmatpush1.msra.mxu0 0.0
    %989 = vmatprep.subr.mxu0 0.0
    %990 = vmatpush1.msra.mxu0 0.0
    %991 = vmatprep.mubr.f32.mxu0 0.0
    %992 = vmatmul.mubr.f32.gmra.mrb[0].mxu0 %v922
    %v993 = vpop.f32.mrb[0].mxu0
    %v994 = vadd.f32 0.0, %v993
    %v995 = vpop.f32.mrb[0].mxu0
    %996 = vmatprep.mubr.f32.mxu0 0.0
    %997 = vmatmul.mubr.f32.gmra.mrb[0].mxu0 %v925
    %v998 = vpop.f32.mrb[0].mxu0
    %v999 = vadd.f32 0.0, %v998
    %v1000 = vpop.f32.mrb[0].mxu0
    %1001 = vdwg.mxu0
    %v1002 = vmul.f32 %v994, 0.5
    %v1003 = vmul.f32 %v999, 0.5
    %v1004 = vadd.f32 %v109, %v1002
    %v1005 = vadd.f32 %v110, %v1003
    %v1006 = vld [vmem:[%s2] sm:$0x1]
    %v1007 = vsel %vm112, %v1004, 0.0
    %1008 = vadd.xlane.f32.xlu0 %v1007
    %v1009 = vpop.xlane.xlu0 %1008
    %v1010 = vsel %vm112, %v1005, 0.0
    %1011 = vadd.xlane.f32.xlu0 %v1010
    %v1012 = vpop.xlane.xlu0 %1011
    %v1013 = vmul.f32 %v1009, %v119
    %v1014 = vmul.f32 %v1012, %v119
    %v1015 = vmul.f32 %v1004, %v1004
    %v1016 = vmul.f32 %v1005, %v1005
    %v1017 = vsel %vm112, %v1015, 0.0
    %1018 = vadd.xlane.f32.xlu0 %v1017
    %v1019 = vpop.xlane.xlu0 %1018
    %v1020 = vsel %vm112, %v1016, 0.0
    %1021 = vadd.xlane.f32.xlu0 %v1020
    %v1022 = vpop.xlane.xlu0 %1021
    %v1023 = vmul.f32 %v1019, %v119
    %v1024 = vmul.f32 %v1022, %v119
    %v1025 = vmul.f32 %v1013, %v1013
    %v1026 = vmul.f32 %v1014, %v1014
    %v1027 = vsub.f32 %v1023, %v1025
    %v1028 = vsub.f32 %v1024, %v1026
    %v1029 = vsub.f32 %v1004, %v1013
    %v1030 = vsub.f32 %v1005, %v1014
    %v1031 = vadd.f32 %v1027, 1e-05
    %v1032 = vadd.f32 %v1028, 1e-05
    %v1033 = vrsqrt.pop %v1031
    %v1034 = vrsqrt.pop %v1032
    %v1035 = vmul.f32 %v1029, %v1033
    %v1036 = vmul.f32 %v1030, %v1034
    %v1038 = vlaneseq
    %v1039 = vshrl.u32 %v1038, 7
    %v1040 = vsub.s32 0, %v1039
    %v1041 = vrot.slane %v1006, %v1040
    %v1043 = vmul.f32 %v1035, %v1041
    %v1044 = vmul.f32 %v1036, %v1041
    %v1045 = vld [vmem:[%s14] sm:$0xff]
    %v1046 = vld [vmem:[%s14 + $0x8] sm:$0xff]
    %v1047 = vld [vmem:[%s14 + $0x10] sm:$0xff]
    %v1048 = vld [vmem:[%s14 + $0x18] sm:$0xff]
    %v1049 = vld [vmem:[%s14 + $0x20] sm:$0xff]
    %v1050 = vld [vmem:[%s14 + $0x28] sm:$0xff]
    %v1051 = vld [vmem:[%s14 + $0x30] sm:$0xff]
    %v1052 = vld [vmem:[%s14 + $0x38] sm:$0xff]
    %v1054 = vsel %vm112, %v1043, 0
    %v1057 = vsel %vm112, %v1044, 0
    %1059 = vmatprep.subr.mxu0 %v1046
    %1060 = vmatpush1.msra.mxu0 %v1045
    %1061 = vmatprep.subr.mxu0 %v1048
    %1062 = vmatpush1.msra.mxu0 %v1047
    %1063 = vmatprep.subr.mxu0 %v1050
    %1064 = vmatpush1.msra.mxu0 %v1049
    %1065 = vmatprep.subr.mxu0 %v1052
    %1066 = vmatpush1.msra.mxu0 %v1051
    %1067 = vmatprep.subr.mxu0 0.0
    %1068 = vmatpush1.msra.mxu0 0.0
    %1069 = vmatprep.subr.mxu0 0.0
    %1070 = vmatpush1.msra.mxu0 0.0
    %1071 = vmatprep.subr.mxu0 0.0
    %1072 = vmatpush1.msra.mxu0 0.0
    %1073 = vmatprep.subr.mxu0 0.0
    %1074 = vmatpush1.msra.mxu0 0.0
    %1075 = vmatprep.subr.mxu0 0.0
    %1076 = vmatpush1.msra.mxu0 0.0
    %1077 = vmatprep.subr.mxu0 0.0
    %1078 = vmatpush1.msra.mxu0 0.0
    %1079 = vmatprep.subr.mxu0 0.0
    %1080 = vmatpush1.msra.mxu0 0.0
    %1081 = vmatprep.subr.mxu0 0.0
    %1082 = vmatpush1.msra.mxu0 0.0
    %1083 = vmatprep.subr.mxu0 0.0
    %1084 = vmatpush1.msra.mxu0 0.0
    %1085 = vmatprep.subr.mxu0 0.0
    %1086 = vmatpush1.msra.mxu0 0.0
    %1087 = vmatprep.subr.mxu0 0.0
    %1088 = vmatpush1.msra.mxu0 0.0
    %1089 = vmatprep.subr.mxu0 0.0
    %1090 = vmatpush1.msra.mxu0 0.0
    %1091 = vmatprep.subr.mxu0 0.0
    %1092 = vmatpush1.msra.mxu0 0.0
    %1093 = vmatprep.subr.mxu0 0.0
    %1094 = vmatpush1.msra.mxu0 0.0
    %1095 = vmatprep.subr.mxu0 0.0
    %1096 = vmatpush1.msra.mxu0 0.0
    %1097 = vmatprep.subr.mxu0 0.0
    %1098 = vmatpush1.msra.mxu0 0.0
    %1099 = vmatprep.subr.mxu0 0.0
    %1100 = vmatpush1.msra.mxu0 0.0
    %1101 = vmatprep.subr.mxu0 0.0
    %1102 = vmatpush1.msra.mxu0 0.0
    %1103 = vmatprep.subr.mxu0 0.0
    %1104 = vmatpush1.msra.mxu0 0.0
    %1105 = vmatprep.subr.mxu0 0.0
    %1106 = vmatpush1.msra.mxu0 0.0
    %1107 = vmatprep.subr.mxu0 0.0
    %1108 = vmatpush1.msra.mxu0 0.0
    %1109 = vmatprep.subr.mxu0 0.0
    %1110 = vmatpush1.msra.mxu0 0.0
    %1111 = vmatprep.subr.mxu0 0.0
    %1112 = vmatpush1.msra.mxu0 0.0
    %1113 = vmatprep.subr.mxu0 0.0
    %1114 = vmatpush1.msra.mxu0 0.0
    %1115 = vmatprep.subr.mxu0 0.0
    %1116 = vmatpush1.msra.mxu0 0.0
    %1117 = vmatprep.subr.mxu0 0.0
    %1118 = vmatpush1.msra.mxu0 0.0
    %1119 = vmatprep.subr.mxu0 0.0
    %1120 = vmatpush1.msra.mxu0 0.0
    %1121 = vmatprep.subr.mxu0 0.0
    %1122 = vmatpush1.msra.mxu0 0.0
    %1123 = vmatprep.mubr.f32.mxu0 0.0
    %1124 = vmatmul.mubr.f32.gmra.mrb[0].mxu0 %v1054
    %v1125 = vpop.f32.mrb[0].mxu0
    %v1126 = vadd.f32 0.0, %v1125
    %v1127 = vpop.f32.mrb[0].mxu0
    %v1128 = vadd.f32 0.0, %v1127
    %1129 = vmatprep.mubr.f32.mxu0 0.0
    %1130 = vmatmul.mubr.f32.gmra.mrb[0].mxu0 %v1057
    %v1131 = vpop.f32.mrb[0].mxu0
    %v1132 = vadd.f32 0.0, %v1131
    %v1133 = vpop.f32.mrb[0].mxu0
    %v1134 = vadd.f32 0.0, %v1133
    %1135 = vdwg.mxu0
    %v1136 = vxor.u32 %v1128, 2147483648
    %v1137 = vxor.u32 %v1134, 2147483648
    %v1138 = vmul.f32 %v1136, 1.442695
    %v1139 = vpow.pop %v1138
    %v1140 = vmul.f32 %v1137, 1.442695
    %v1141 = vpow.pop %v1140
    %v1142 = vadd.f32 %v1139, 1.0
    %v1143 = vadd.f32 %v1141, 1.0
    %v1144 = vrcp.pop %v1142
    %v1145 = vmul.f32 1.0, %v1144
    %v1146 = vrcp.pop %v1143
    %v1147 = vmul.f32 1.0, %v1146
    %v1148 = vmul.f32 %v1128, %v1145
    %v1149 = vmul.f32 %v1134, %v1147
    %v1150 = vmul.f32 %v1126, %v1148
    %v1151 = vmul.f32 %v1132, %v1149
    %v1152 = vld [vmem:[%s15] sm:$0xff]
    %v1153 = vld [vmem:[%s15 + $0x8] sm:$0xff]
    %v1154 = vld [vmem:[%s15 + $0x10] sm:$0xff]
    %v1155 = vld [vmem:[%s15 + $0x18] sm:$0xff]
    %v1156 = vld [vmem:[%s15 + $0x20] sm:$0xff]
    %v1157 = vld [vmem:[%s15 + $0x28] sm:$0xff]
    %v1158 = vld [vmem:[%s15 + $0x30] sm:$0xff]
    %v1159 = vld [vmem:[%s15 + $0x38] sm:$0xff]
    %v1160 = vld [vmem:[%s15 + $0x40] sm:$0xff]
    %v1161 = vld [vmem:[%s15 + $0x48] sm:$0xff]
    %v1162 = vld [vmem:[%s15 + $0x50] sm:$0xff]
    %v1163 = vld [vmem:[%s15 + $0x58] sm:$0xff]
    %v1164 = vld [vmem:[%s15 + $0x60] sm:$0xff]
    %v1165 = vld [vmem:[%s15 + $0x68] sm:$0xff]
    %v1166 = vld [vmem:[%s15 + $0x70] sm:$0xff]
    %v1167 = vld [vmem:[%s15 + $0x78] sm:$0xff]
    %1168 = vmatprep.subr.mxu0 0.0
    %1169 = vmatpush1.msra.mxu0 %v1152
    %1170 = vmatprep.subr.mxu0 0.0
    %1171 = vmatpush1.msra.mxu0 %v1153
    %1172 = vmatprep.subr.mxu0 0.0
    %1173 = vmatpush1.msra.mxu0 %v1154
    %1174 = vmatprep.subr.mxu0 0.0
    %1175 = vmatpush1.msra.mxu0 %v1155
    %1176 = vmatprep.subr.mxu0 0.0
    %1177 = vmatpush1.msra.mxu0 %v1156
    %1178 = vmatprep.subr.mxu0 0.0
    %1179 = vmatpush1.msra.mxu0 %v1157
    %1180 = vmatprep.subr.mxu0 0.0
    %1181 = vmatpush1.msra.mxu0 %v1158
    %1182 = vmatprep.subr.mxu0 0.0
    %1183 = vmatpush1.msra.mxu0 %v1159
    %1184 = vmatprep.subr.mxu0 0.0
    %1185 = vmatpush1.msra.mxu0 %v1160
    %1186 = vmatprep.subr.mxu0 0.0
    %1187 = vmatpush1.msra.mxu0 %v1161
    %1188 = vmatprep.subr.mxu0 0.0
    %1189 = vmatpush1.msra.mxu0 %v1162
    %1190 = vmatprep.subr.mxu0 0.0
    %1191 = vmatpush1.msra.mxu0 %v1163
    %1192 = vmatprep.subr.mxu0 0.0
    %1193 = vmatpush1.msra.mxu0 %v1164
    %1194 = vmatprep.subr.mxu0 0.0
    %1195 = vmatpush1.msra.mxu0 %v1165
    %1196 = vmatprep.subr.mxu0 0.0
    %1197 = vmatpush1.msra.mxu0 %v1166
    %1198 = vmatprep.subr.mxu0 0.0
    %1199 = vmatpush1.msra.mxu0 %v1167
    %1200 = vmatprep.subr.mxu0 0.0
    %1201 = vmatpush1.msra.mxu0 0.0
    %1202 = vmatprep.subr.mxu0 0.0
    %1203 = vmatpush1.msra.mxu0 0.0
    %1204 = vmatprep.subr.mxu0 0.0
    %1205 = vmatpush1.msra.mxu0 0.0
    %1206 = vmatprep.subr.mxu0 0.0
    %1207 = vmatpush1.msra.mxu0 0.0
    %1208 = vmatprep.subr.mxu0 0.0
    %1209 = vmatpush1.msra.mxu0 0.0
    %1210 = vmatprep.subr.mxu0 0.0
    %1211 = vmatpush1.msra.mxu0 0.0
    %1212 = vmatprep.subr.mxu0 0.0
    %1213 = vmatpush1.msra.mxu0 0.0
    %1214 = vmatprep.subr.mxu0 0.0
    %1215 = vmatpush1.msra.mxu0 0.0
    %1216 = vmatprep.subr.mxu0 0.0
    %1217 = vmatpush1.msra.mxu0 0.0
    %1218 = vmatprep.subr.mxu0 0.0
    %1219 = vmatpush1.msra.mxu0 0.0
    %1220 = vmatprep.subr.mxu0 0.0
    %1221 = vmatpush1.msra.mxu0 0.0
    %1222 = vmatprep.subr.mxu0 0.0
    %1223 = vmatpush1.msra.mxu0 0.0
    %1224 = vmatprep.subr.mxu0 0.0
    %1225 = vmatpush1.msra.mxu0 0.0
    %1226 = vmatprep.subr.mxu0 0.0
    %1227 = vmatpush1.msra.mxu0 0.0
    %1228 = vmatprep.subr.mxu0 0.0
    %1229 = vmatpush1.msra.mxu0 0.0
    %1230 = vmatprep.subr.mxu0 0.0
    %1231 = vmatpush1.msra.mxu0 0.0
    %1232 = vmatprep.mubr.f32.mxu0 0.0
    %1233 = vmatmul.mubr.f32.gmra.mrb[0].mxu0 %v1150
    %v1234 = vpop.f32.mrb[0].mxu0
    %v1235 = vadd.f32 0.0, %v1234
    %v1236 = vpop.f32.mrb[0].mxu0
    %1237 = vmatprep.mubr.f32.mxu0 0.0
    %1238 = vmatmul.mubr.f32.gmra.mrb[0].mxu0 %v1151
    %v1239 = vpop.f32.mrb[0].mxu0
    %v1240 = vadd.f32 0.0, %v1239
    %v1241 = vpop.f32.mrb[0].mxu0
    %1242 = vdwg.mxu0
    %v1243 = vmul.f32 %v1235, 0.5
    %v1244 = vmul.f32 %v1240, 0.5
    %v1245 = vadd.f32 %v1004, %v1243
    %v1246 = vadd.f32 %v1005, %v1244
    %1247 = vst.msk [vmem:[#allocation10] sm:$0xff] %vm112, %v1245
    %1248 = vst.msk [vmem:[#allocation10 + $0x8] sm:$0xff] %vm112, %v1246
    // Predicated region
    $region82: #{tpu_custom_call.1} parent=1 // pred_check
      _
    $region83: #{tpu_custom_call.1} parent=1 // pred_check_branch
      %1250 = sbr.rel (0) target = $region85
    $region84: #{tpu_custom_call.1} parent=1 // pred_region
      %s1252 = ssub.s32 256, 256
      %1253 = vsyncadd [#allocation4], %s1252
      %s1254 = sshll.u32 [#allocation10], 4
      %s1255 = int_to_ptr.vmem [resolvable:$true] %s1254
      %1260 = dma.vmem_to_hbm [thread:$0]  %s1255, 256, %s16, [#allocation4], 128, 128, 8
    $region85: #{tpu_custom_call.1} parent=1 // pred_fallthru
      _
    // Predicated region
    $region86: #{tpu_custom_call.1} parent=1 // pred_check
      _
    $region87: #{tpu_custom_call.1} parent=1 // pred_check_branch
      %1262 = sbr.rel (0) target = $region89
    $region88: #{tpu_custom_call.1} parent=1 // pred_region
      %1263 = dma.done [#allocation4], 256
    $region89: #{tpu_custom_call.1} parent=1 // pred_fallthru
      _
    %1264 = vsyncpa [#allocation3], 1
    %1265 = vsyncpa [#allocation6], 1
    %1266 = vsyncpa [#allocation9], 1
    %1267 = vsyncpa [#allocation4], 1

</llo_original>
